<compile_context>
chip_gen: v7x
topology: tpu7x:2x2x1
jax: 0.10.0
libtpu: 0.0.40
codegen_flags: <defaults>
</compile_context>

<pallas_src>
import jax
import jax.numpy as jnp
import numpy as np
from jax.experimental import pallas as pl
from jax.experimental.pallas import tpu as pltpu


IN_CHANS = 3
STEM_CH = 32              # stem conv output channels (BN folded into W/b)
N_FEATURES = 128          # stand-in for timm classifier.in_features
NUM_CLASSES = 4
S2D_CH = 4 * IN_CHANS     # 12 space-to-depth channels
S2D_CH_PAD = 16           # padded to two full sublane tiles (zero channels)


def _cdiv(a, b):
    return -(-a // b)


def _round_up(x, m):
    return _cdiv(x, m) * m


def _chip_generation():
    try:
        kind = jax.devices()[0].device_kind.lower()
    except Exception:
        return 0
    for g in (7, 6, 5, 4, 3):
        if "v{}".format(g) in kind:
            return g
    return 0


_GEN = _chip_generation()
_USE_BF16_EW = _GEN >= 6                      # v5e/older: no bf16 VPU/EUP path
if _GEN >= 7:
    _T_CAP, _VMEM_LIMIT = 8192, 48 * 1024 * 1024   # v7x: 64 MiB physical VMEM
elif _GEN == 6:
    _T_CAP, _VMEM_LIMIT = 8192, 64 * 1024 * 1024
elif _GEN == 5:
    _T_CAP, _VMEM_LIMIT = 4096, 64 * 1024 * 1024   # v5e: 16 MiB scoped default
else:
    _T_CAP, _VMEM_LIMIT = 2048, None


# ----------------------------------------------------------------------------
# Fused kernel: stem conv (4 shifted matmuls) + SiLU -> 1x1 conv_head + SiLU
# -> masked global-average-pool accumulated in the resident output block.
# Grid = (B, n_pixel_tiles); batch "parallel" (megacore), pixel axis
# "arbitrary" (carries the pooling reduction).
# ----------------------------------------------------------------------------
def _make_fused_kernel(inv_hw, shifts, tile, ew_dtype):
    def kernel(x_ref, w2_ref, sb_ref, hw_ref, hb_ref, mask_ref, o_ref):
        t = pl.program_id(1)

        @pl.when(t == 0)
        def _():
            o_ref[...] = jnp.zeros_like(o_ref)

        # Stem 3x3/s2 conv == 2x2/s1 conv on the space-to-depth block:
        # 4 accumulated (32,16)x(16,tile) MXU matmuls over lane-shifted slabs.
        h = jnp.dot(w2_ref[0], x_ref[:, pl.ds(shifts[0], tile)],
                    preferred_element_type=jnp.float32)
        for i in range(1, 4):
            h = h + jnp.dot(w2_ref[i], x_ref[:, pl.ds(shifts[i], tile)],
                            preferred_element_type=jnp.float32)

        # BN-folded bias + SiLU (bf16 on v6e/v7x, f32 on v5e/older).
        h = h.astype(ew_dtype) + sb_ref[...].astype(ew_dtype)
        h = h * jax.nn.sigmoid(h)

        # 1x1 conv_head + bias + SiLU, fused (h never leaves VMEM).
        f = jnp.dot(hw_ref[...], h.astype(jnp.bfloat16),
                    preferred_element_type=jnp.float32)
        f = f.astype(ew_dtype) + hb_ref[...].astype(ew_dtype)
        f = f * jax.nn.sigmoid(f)

        # Global average pool: masked mat-vec on the MXU with f32 accumulation
        # into the resident output block.  The precomputed mask zeroes the
        # flattened-layout pad columns / tail, so no iota/compare/select here.
        o_ref[...] += jnp.dot(f, mask_ref[...].astype(ew_dtype),
                              preferred_element_type=jnp.float32)

        @pl.when(t == pl.num_programs(1) - 1)
        def _():
            o_ref[...] = o_ref[...] * inv_hw

    return kernel


def fused_backbone_pool(x_tiles, w2, stem_b, head_wt, head_b, mask, *,
                        tile, shifts, inv_hw):
    """x_tiles: (B, n_tiles, 16, tile+halo) bf16 -> pooled (B, 128, 1) f32."""
    B, n_tiles, cp, twid = x_tiles.shape
    ew_dtype = jnp.bfloat16 if _USE_BF16_EW else jnp.float32
    kernel = _make_fused_kernel(inv_hw, shifts, tile, ew_dtype)
    return pl.pallas_call(
        kernel,
        out_shape=jax.ShapeDtypeStruct((B, N_FEATURES, 1), jnp.float32),
        grid=(B, n_tiles),
        in_specs=[
            # TODO(synk): if xprof shows exposed DMA on this stream at large
            # tiles, add pipeline_mode=pl.Buffered(3) here only.
            pl.BlockSpec((None, None, cp, twid), lambda b, t: (b, t, 0, 0)),
            pl.BlockSpec((4, STEM_CH, cp), lambda b, t: (0, 0, 0)),     # stem W taps
            pl.BlockSpec((STEM_CH, 1), lambda b, t: (0, 0)),            # stem b
            pl.BlockSpec((N_FEATURES, STEM_CH), lambda b, t: (0, 0)),   # head W^T
            pl.BlockSpec((N_FEATURES, 1), lambda b, t: (0, 0)),         # head b
            pl.BlockSpec((tile, 1), lambda b, t: (t, 0)),               # pool mask
        ],
        out_specs=pl.BlockSpec((None, N_FEATURES, 1), lambda b, t: (b, 0, 0)),
        compiler_params=pltpu.CompilerParams(
            dimension_semantics=("parallel", "arbitrary"),
            vmem_limit_bytes=_VMEM_LIMIT),
    )(x_tiles, w2, stem_b, head_wt, head_b, mask)


# ----------------------------------------------------------------------------
# Glue: space-to-depth repack (pure layout, ~1x the input bytes, no im2col).
# ----------------------------------------------------------------------------
def _space_to_depth_tiles(x_nchw, tile, halo, n_tiles):
    """(B,3,H,W) f32 -> (B, n_tiles, 16, tile+halo) bf16 tiled+haloed slabs."""
    B, C, H, W = x_nchw.shape
    Ho, Wo = (H + 1) // 2, (W + 1) // 2
    wp = Wo + 1
    ph, pw = 2 * Ho + 1 - H, 2 * Wo + 1 - W
    xp = jnp.pad(x_nchw, ((0, 0), (0, 0), (1, ph), (1, pw)))
    # 4 stride-2 phases, each (B, C, Ho+1, Wo+1); zeros where the conv's
    # padding=1 taps fall outside the image.
    e = xp[:, :, 1::2, 1::2]      # x[2i,   2j  ]
    f = xp[:, :, 1::2, 0::2]      # x[2i,   2j-1]
    g = xp[:, :, 0::2, 1::2]      # x[2i-1, 2j  ]
    k = xp[:, :, 0::2, 0::2]      # x[2i-1, 2j-1]
    x12 = jnp.concatenate([e, f, g, k], axis=1)                 # (B, 12, Ho+1, wp)
    x12 = jnp.pad(x12, ((0, 0), (0, S2D_CH_PAD - S2D_CH), (0, 0), (0, 0)))
    flat = x12.reshape(B, S2D_CH_PAD, (Ho + 1) * wp).astype(jnp.bfloat16)
    total = n_tiles * tile + halo
    assert total >= (Ho + 1) * wp
    flat = jnp.pad(flat, ((0, 0), (0, 0), (0, total - (Ho + 1) * wp)))
    # Tiled with a tiny duplicated halo (halo = wp+1 << tile) so every grid
    # step sees all 4 tap shifts without overlapping BlockSpecs.
    return jnp.stack(
        [flat[:, :, t * tile: t * tile + tile + halo] for t in range(n_tiles)],
        axis=1)


def _stem_w2_blocks(stem_w):
    """(3,3,C,32) stem weight -> (4, 32, 16) bf16 tap blocks.

    Block a*2+b multiplies the s2d slab lane-shifted by a*wp + b; channel
    order inside each block is [ee, eo, oe, oo] phase + 4 zero pad channels.
    """
    w = stem_w
    z = jnp.zeros_like(w[0, 0])                                  # (C, 32)
    blocks = jnp.stack([
        jnp.concatenate([w[1, 1], w[1, 0], w[0, 1], w[0, 0]], axis=0),
        jnp.concatenate([z,       w[1, 2], z,       w[0, 2]], axis=0),
        jnp.concatenate([z,       z,       w[2, 1], w[2, 0]], axis=0),
        jnp.concatenate([z,       z,       z,       w[2, 2]], axis=0),
    ])                                                           # (4, 12, 32)
    blocks = jnp.pad(blocks, ((0, 0), (0, S2D_CH_PAD - S2D_CH), (0, 0)))
    return jnp.transpose(blocks, (0, 2, 1)).astype(jnp.bfloat16)  # (4, 32, 16)


# ----------------------------------------------------------------------------
# Model: parameters + forward
# ----------------------------------------------------------------------------
def init_params(key):
    k1, k2, k3, k4, k5, k6 = jax.random.split(key, 6)
    p = {}
    # Stem: Conv2d(3, 32, 3, stride=2, padding=1), BN folded (scale in W, shift
    # in b).  NOTE: real PyTorch Conv2d weights are (O, I, kH, kW) - permute to
    # (kH, kW, I, O) before use here.
    p["stem_w"] = 0.1 * jax.random.normal(k1, (3, 3, IN_CHANS, STEM_CH), jnp.float32)
    p["stem_b"] = 0.01 * jax.random.normal(k2, (STEM_CH,), jnp.float32)
    # conv_head: 1x1 conv STEM_CH -> N_FEATURES, BN folded.
    p["head_w"] = 0.1 * jax.random.normal(k3, (STEM_CH, N_FEATURES), jnp.float32)
    p["head_b"] = 0.01 * jax.random.normal(k4, (N_FEATURES,), jnp.float32)
    # fc: Linear(N_FEATURES, 4)
    p["fc_w"] = 0.1 * jax.random.normal(k5, (N_FEATURES, NUM_CLASSES), jnp.float32)
    p["fc_b"] = 0.01 * jax.random.normal(k6, (NUM_CLASSES,), jnp.float32)
    return p


@jax.jit
def covid_effnet_forward(x_nchw, params):
    x = x_nchw.astype(jnp.float32)
    B, C, H, W = x.shape
    Ho, Wo = (H + 1) // 2, (W + 1) // 2
    wp = Wo + 1                    # flattened row width (1 pad column per row)
    halo = wp + 1                  # max lane shift needed by the 2x2 taps
    L = Ho * wp                    # flattened output positions (incl. pad col)

    # Tight, per-chip-capped pixel tile (multiple of 128 lanes).
    n_tiles = max(1, _cdiv(L, _T_CAP))
    tile = _round_up(_cdiv(L, n_tiles), 128)
    l_pad = n_tiles * tile

    x_tiles = _space_to_depth_tiles(x, tile, halo, n_tiles)

    # Validity mask over the flattened pixel axis (per-row pad column and the
    # tail are excluded from the pooled average); built once at trace time.
    q = np.arange(l_pad)
    valid = ((q % wp) < Wo) & (q < L)
    mask = jnp.asarray(valid.astype(np.float32).reshape(l_pad, 1),
                       dtype=jnp.bfloat16)

    w2 = _stem_w2_blocks(params["stem_w"])
    stem_b = params["stem_b"].reshape(STEM_CH, 1).astype(jnp.float32)
    head_wt = params["head_w"].T.astype(jnp.bfloat16)            # (128, 32)
    head_b = params["head_b"].reshape(N_FEATURES, 1).astype(jnp.float32)

    pooled = fused_backbone_pool(
        x_tiles, w2, stem_b, head_wt, head_b, mask,
        tile=tile, shifts=(0, 1, wp, wp + 1), inv_hw=1.0 / float(Ho * Wo))
    pooled = pooled[:, :, 0]                                     # (B, 128) f32

    # Dropout(0.5) is identity in eval; Linear(F, 4) as one tiny XLA matmul.
    # TODO(synk): v7x small-batch case (B==1) leaves one TensorCore idle; a
    # 2-way core split of the pixel reduction would recover it.
    return pooled @ params["fc_w"] + params["fc_b"]


# Pure-JAX reference (f32) for a correctness sanity check.
def reference_forward(x_nchw, params):
    x = x_nchw.astype(jnp.float32)
    h = jax.lax.conv_general_dilated(
        x, params["stem_w"], window_strides=(2, 2), padding=((1, 1), (1, 1)),
        dimension_numbers=("NCHW", "HWIO", "NCHW"))
    h = h + params["stem_b"].reshape(1, -1, 1, 1)
    h = h * jax.nn.sigmoid(h)
    f = jnp.einsum("bchw,cd->bdhw", h, params["head_w"])
    f = f + params["head_b"].reshape(1, -1, 1, 1)
    f = f * jax.nn.sigmoid(f)
    pooled = jnp.mean(f, axis=(2, 3))
    return pooled @ params["fc_w"] + params["fc_b"]


if __name__ == "__main__":
    key = jax.random.PRNGKey(0)
    kx, kp = jax.random.split(key)
    # PyTorch-style NCHW input: batch=2, in_chans=3, 32x32
    x = jax.random.normal(kx, (2, IN_CHANS, 32, 32), dtype=jnp.float32)
    params = init_params(kp)

    out = covid_effnet_forward(x, params)
    out = jax.block_until_ready(out)
    assert out.shape == (2, NUM_CLASSES) and out.dtype == jnp.float32

    ref = reference_forward(x, params)
    err = float(jnp.max(jnp.abs(out - ref)))
    assert err < 7.5e-2, "max |kernel - reference| = {}".format(err)
    print("KERNEL_OK")
</pallas_src>

<mosaic_0001>
module attributes {stable_mosaic.version = 11 : i64} {
  func.func @kernel(%arg0: i32, %arg1: i32, %arg2: memref<1x1x16x402xbf16, #tpu.memory_space<vmem>>, %arg3: memref<4x32x16xbf16, #tpu.memory_space<vmem>>, %arg4: memref<32x1xf32, #tpu.memory_space<vmem>>, %arg5: memref<128x32xbf16, #tpu.memory_space<vmem>>, %arg6: memref<128x1xf32, #tpu.memory_space<vmem>>, %arg7: memref<384x1xbf16, #tpu.memory_space<vmem>>, %arg8: memref<1x128x1xf32, #tpu.memory_space<vmem>>) attributes {dimension_semantics = [#tpu.dimension_semantics<parallel>, #tpu.dimension_semantics<arbitrary>], iteration_bounds = array<i64: 2, 1>, scalar_prefetch = 0 : i64, scratch_operands = 0 : i64, tpu.core_type = #tpu.core_type<tc>, window_params = [{transform_indices = @transform_0, window_bounds = array<i64: 1, 1, 16, 402>}, {pipeline_mode = #tpu.pipeline_mode<synchronous>, transform_indices = @transform_1, window_bounds = array<i64: 4, 32, 16>}, {pipeline_mode = #tpu.pipeline_mode<synchronous>, transform_indices = @transform_2, window_bounds = array<i64: 32, 1>}, {pipeline_mode = #tpu.pipeline_mode<synchronous>, transform_indices = @transform_3, window_bounds = array<i64: 128, 32>}, {pipeline_mode = #tpu.pipeline_mode<synchronous>, transform_indices = @transform_4, window_bounds = array<i64: 128, 1>}, {transform_indices = @transform_5, window_bounds = array<i64: 384, 1>}, {transform_indices = @transform_6, window_bounds = array<i64: 1, 128, 1>}]} {
    %c0_i32 = arith.constant 0 : i32
    %0 = arith.cmpi eq, %arg1, %c0_i32 : i32
    %1 = arith.extui %0 : i1 to i32
    %c0_i32_0 = arith.constant 0 : i32
    %2 = arith.cmpi ne, %1, %c0_i32_0 : i32
    scf.if %2 {
      %cst_46 = arith.constant 0.000000e+00 : f32
      %59 = vector.broadcast %cst_46 : f32 to vector<128x1xf32>
      %c0_47 = arith.constant 0 : index
      %c0_48 = arith.constant 0 : index
      %c0_49 = arith.constant 0 : index
      %60 = vector.load %arg8[%c0_47, %c0_48, %c0_49] : memref<1x128x1xf32, #tpu.memory_space<vmem>>, vector<1x128x1xf32>
      %61 = vector.shape_cast %60 : vector<1x128x1xf32> to vector<128x1xf32>
      %62 = vector.shape_cast %59 : vector<128x1xf32> to vector<1x128x1xf32>
      tpu.vector_store %arg8[%c0_47, %c0_48, %c0_49], %62 {strides = array<i32>} : memref<1x128x1xf32, #tpu.memory_space<vmem>>, vector<1x128x1xf32>,
    } else {
    }
    %c0 = arith.constant 0 : index
    %c0_1 = arith.constant 0 : index
    %c0_2 = arith.constant 0 : index
    %3 = vector.load %arg3[%c0, %c0_1, %c0_2] : memref<4x32x16xbf16, #tpu.memory_space<vmem>>, vector<1x32x16xbf16>
    %4 = vector.shape_cast %3 : vector<1x32x16xbf16> to vector<32x16xbf16>
    %c0_3 = arith.constant 0 : index
    %c0_4 = arith.constant 0 : index
    %c0_5 = arith.constant 0 : index
    %c0_6 = arith.constant 0 : index
    %5 = vector.load %arg2[%c0_3, %c0_4, %c0_5, %c0_6] : memref<1x1x16x402xbf16, #tpu.memory_space<vmem>>, vector<1x1x16x384xbf16>
    %6 = vector.shape_cast %5 : vector<1x1x16x384xbf16> to vector<16x384xbf16>
    %cst = arith.constant dense<0.000000e+00> : vector<32x384xf32>
    %7 = tpu.matmul %4, %6, %cst {dimension_numbers = #tpu.dot_dimension_numbers<[1], [0], [0], [1], [0, 0, 1, 1], [], []>} : vector<32x16xbf16>, vector<16x384xbf16>, vector<32x384xf32> -> vector<32x384xf32>
    %c1 = arith.constant 1 : index
    %c0_7 = arith.constant 0 : index
    %c0_8 = arith.constant 0 : index
    %8 = vector.load %arg3[%c1, %c0_7, %c0_8] : memref<4x32x16xbf16, #tpu.memory_space<vmem>>, vector<1x32x16xbf16>
    %9 = vector.shape_cast %8 : vector<1x32x16xbf16> to vector<32x16xbf16>
    %c0_9 = arith.constant 0 : index
    %c0_10 = arith.constant 0 : index
    %c0_11 = arith.constant 0 : index
    %c1_12 = arith.constant 1 : index
    %10 = vector.load %arg2[%c0_9, %c0_10, %c0_11, %c1_12] : memref<1x1x16x402xbf16, #tpu.memory_space<vmem>>, vector<1x1x16x384xbf16>
    %11 = vector.shape_cast %10 : vector<1x1x16x384xbf16> to vector<16x384xbf16>
    %cst_13 = arith.constant dense<0.000000e+00> : vector<32x384xf32>
    %12 = tpu.matmul %9, %11, %cst_13 {dimension_numbers = #tpu.dot_dimension_numbers<[1], [0], [0], [1], [0, 0, 1, 1], [], []>} : vector<32x16xbf16>, vector<16x384xbf16>, vector<32x384xf32> -> vector<32x384xf32>
    %13 = arith.addf %7, %12 : vector<32x384xf32>
    %c2 = arith.constant 2 : index
    %c0_14 = arith.constant 0 : index
    %c0_15 = arith.constant 0 : index
    %14 = vector.load %arg3[%c2, %c0_14, %c0_15] : memref<4x32x16xbf16, #tpu.memory_space<vmem>>, vector<1x32x16xbf16>
    %15 = vector.shape_cast %14 : vector<1x32x16xbf16> to vector<32x16xbf16>
    %c0_16 = arith.constant 0 : index
    %c0_17 = arith.constant 0 : index
    %c0_18 = arith.constant 0 : index
    %c17 = arith.constant 17 : index
    %16 = vector.load %arg2[%c0_16, %c0_17, %c0_18, %c17] : memref<1x1x16x402xbf16, #tpu.memory_space<vmem>>, vector<1x1x16x384xbf16>
    %17 = vector.shape_cast %16 : vector<1x1x16x384xbf16> to vector<16x384xbf16>
    %cst_19 = arith.constant dense<0.000000e+00> : vector<32x384xf32>
    %18 = tpu.matmul %15, %17, %cst_19 {dimension_numbers = #tpu.dot_dimension_numbers<[1], [0], [0], [1], [0, 0, 1, 1], [], []>} : vector<32x16xbf16>, vector<16x384xbf16>, vector<32x384xf32> -> vector<32x384xf32>
    %19 = arith.addf %13, %18 : vector<32x384xf32>
    %c3 = arith.constant 3 : index
    %c0_20 = arith.constant 0 : index
    %c0_21 = arith.constant 0 : index
    %20 = vector.load %arg3[%c3, %c0_20, %c0_21] : memref<4x32x16xbf16, #tpu.memory_space<vmem>>, vector<1x32x16xbf16>
    %21 = vector.shape_cast %20 : vector<1x32x16xbf16> to vector<32x16xbf16>
    %c0_22 = arith.constant 0 : index
    %c0_23 = arith.constant 0 : index
    %c0_24 = arith.constant 0 : index
    %c18 = arith.constant 18 : index
    %22 = vector.load %arg2[%c0_22, %c0_23, %c0_24, %c18] : memref<1x1x16x402xbf16, #tpu.memory_space<vmem>>, vector<1x1x16x384xbf16>
    %23 = vector.shape_cast %22 : vector<1x1x16x384xbf16> to vector<16x384xbf16>
    %cst_25 = arith.constant dense<0.000000e+00> : vector<32x384xf32>
    %24 = tpu.matmul %21, %23, %cst_25 {dimension_numbers = #tpu.dot_dimension_numbers<[1], [0], [0], [1], [0, 0, 1, 1], [], []>} : vector<32x16xbf16>, vector<16x384xbf16>, vector<32x384xf32> -> vector<32x384xf32>
    %25 = arith.addf %19, %24 : vector<32x384xf32>
    %c0_26 = arith.constant 0 : index
    %c0_27 = arith.constant 0 : index
    %26 = vector.load %arg4[%c0_26, %c0_27] : memref<32x1xf32, #tpu.memory_space<vmem>>, vector<32x1xf32>
    %27 = vector.broadcast %26 : vector<32x1xf32> to vector<32x384xf32>
    %28 = arith.addf %25, %27 : vector<32x384xf32>
    %29 = arith.negf %28 : vector<32x384xf32>
    %30 = math.exp %29 : vector<32x384xf32>
    %cst_28 = arith.constant 1.000000e+00 : f32
    %31 = vector.broadcast %cst_28 : f32 to vector<32x384xf32>
    %32 = arith.addf %31, %30 : vector<32x384xf32>
    %33 = arith.divf %31, %32 : vector<32x384xf32>
    %34 = arith.mulf %28, %33 : vector<32x384xf32>
    %c0_29 = arith.constant 0 : index
    %c0_30 = arith.constant 0 : index
    %35 = vector.load %arg5[%c0_29, %c0_30] : memref<128x32xbf16, #tpu.memory_space<vmem>>, vector<128x32xbf16>
    %36 = arith.truncf %34 : vector<32x384xf32> to vector<32x384xbf16>
    %cst_31 = arith.constant dense<0.000000e+00> : vector<128x384xf32>
    %37 = tpu.matmul %35, %36, %cst_31 {dimension_numbers = #tpu.dot_dimension_numbers<[1], [0], [0], [1], [0, 0, 1, 1], [], []>} : vector<128x32xbf16>, vector<32x384xbf16>, vector<128x384xf32> -> vector<128x384xf32>
    %c0_32 = arith.constant 0 : index
    %c0_33 = arith.constant 0 : index
    %38 = vector.load %arg6[%c0_32, %c0_33] : memref<128x1xf32, #tpu.memory_space<vmem>>, vector<128x1xf32>
    %39 = vector.broadcast %38 : vector<128x1xf32> to vector<128x384xf32>
    %40 = arith.addf %37, %39 : vector<128x384xf32>
    %41 = arith.negf %40 : vector<128x384xf32>
    %42 = math.exp %41 : vector<128x384xf32>
    %cst_34 = arith.constant 1.000000e+00 : f32
    %43 = vector.broadcast %cst_34 : f32 to vector<128x384xf32>
    %44 = arith.addf %43, %42 : vector<128x384xf32>
    %45 = arith.divf %43, %44 : vector<128x384xf32>
    %46 = arith.mulf %40, %45 : vector<128x384xf32>
    %c0_35 = arith.constant 0 : index
    %c0_36 = arith.constant 0 : index
    %c0_37 = arith.constant 0 : index
    %47 = vector.load %arg8[%c0_35, %c0_36, %c0_37] : memref<1x128x1xf32, #tpu.memory_space<vmem>>, vector<1x128x1xf32>
    %48 = vector.shape_cast %47 : vector<1x128x1xf32> to vector<128x1xf32>
    %c0_38 = arith.constant 0 : index
    %c0_39 = arith.constant 0 : index
    %49 = vector.load %arg7[%c0_38, %c0_39] : memref<384x1xbf16, #tpu.memory_space<vmem>>, vector<384x1xbf16>
    %50 = arith.extf %49 : vector<384x1xbf16> to vector<384x1xf32>
    %cst_40 = arith.constant dense<0.000000e+00> : vector<128x1xf32>
    %51 = tpu.matmul %46, %50, %cst_40 {dimension_numbers = #tpu.dot_dimension_numbers<[1], [0], [0], [1], [0, 0, 1, 1], [], []>} : vector<128x384xf32>, vector<384x1xf32>, vector<128x1xf32> -> vector<128x1xf32>
    %52 = arith.addf %48, %51 : vector<128x1xf32>
    %c0_41 = arith.constant 0 : index
    %c0_42 = arith.constant 0 : index
    %c0_43 = arith.constant 0 : index
    %53 = vector.load %arg8[%c0_41, %c0_42, %c0_43] : memref<1x128x1xf32, #tpu.memory_space<vmem>>, vector<1x128x1xf32>
    %54 = vector.shape_cast %53 : vector<1x128x1xf32> to vector<128x1xf32>
    %55 = vector.shape_cast %52 : vector<128x1xf32> to vector<1x128x1xf32>
    tpu.vector_store %arg8[%c0_41, %c0_42, %c0_43], %55 {strides = array<i32>} : memref<1x128x1xf32, #tpu.memory_space<vmem>>, vector<1x128x1xf32>,
    %c0_i32_44 = arith.constant 0 : i32
    %56 = arith.cmpi eq, %arg1, %c0_i32_44 : i32
    %57 = arith.extui %56 : i1 to i32
    %c0_i32_45 = arith.constant 0 : i32
    %58 = arith.cmpi ne, %57, %c0_i32_45 : i32
    scf.if %58 {
      %c0_46 = arith.constant 0 : index
      %c0_47 = arith.constant 0 : index
      %c0_48 = arith.constant 0 : index
      %59 = vector.load %arg8[%c0_46, %c0_47, %c0_48] : memref<1x128x1xf32, #tpu.memory_space<vmem>>, vector<1x128x1xf32>
      %60 = vector.shape_cast %59 : vector<1x128x1xf32> to vector<128x1xf32>
      %cst_49 = arith.constant 3.906250e-03 : f32
      %61 = vector.broadcast %cst_49 : f32 to vector<128x1xf32>
      %62 = arith.mulf %60, %61 : vector<128x1xf32>
      %c0_50 = arith.constant 0 : index
      %c0_51 = arith.constant 0 : index
      %c0_52 = arith.constant 0 : index
      %63 = vector.load %arg8[%c0_50, %c0_51, %c0_52] : memref<1x128x1xf32, #tpu.memory_space<vmem>>, vector<1x128x1xf32>
      %64 = vector.shape_cast %63 : vector<1x128x1xf32> to vector<128x1xf32>
      %65 = vector.shape_cast %62 : vector<128x1xf32> to vector<1x128x1xf32>
      tpu.vector_store %arg8[%c0_50, %c0_51, %c0_52], %65 {strides = array<i32>} : memref<1x128x1xf32, #tpu.memory_space<vmem>>, vector<1x128x1xf32>,
    } else {
    }
    return
  }
  func.func @transform_0(%arg0: i32, %arg1: i32) -> (i32, i32, i32, i32) {
    %c0_i32 = arith.constant 0 : i32
    %c0_i32_0 = arith.constant 0 : i32
    %c0_i32_1 = arith.constant 0 : i32
    return %arg0, %arg1, %c0_i32, %c0_i32_0 : i32, i32, i32, i32
  }
  func.func @transform_1(%arg0: i32, %arg1: i32) -> (i32, i32, i32) {
    %c0_i32 = arith.constant 0 : i32
    %c0_i32_0 = arith.constant 0 : i32
    %c0_i32_1 = arith.constant 0 : i32
    %c0_i32_2 = arith.constant 0 : i32
    return %c0_i32, %c0_i32_0, %c0_i32_1 : i32, i32, i32
  }
  func.func @transform_2(%arg0: i32, %arg1: i32) -> (i32, i32) {
    %c0_i32 = arith.constant 0 : i32
    %c0_i32_0 = arith.constant 0 : i32
    %c0_i32_1 = arith.constant 0 : i32
    return %c0_i32, %c0_i32_0 : i32, i32
  }
  func.func @transform_3(%arg0: i32, %arg1: i32) -> (i32, i32) {
    %c0_i32 = arith.constant 0 : i32
    %c0_i32_0 = arith.constant 0 : i32
    %c0_i32_1 = arith.constant 0 : i32
    return %c0_i32, %c0_i32_0 : i32, i32
  }
  func.func @transform_4(%arg0: i32, %arg1: i32) -> (i32, i32) {
    %c0_i32 = arith.constant 0 : i32
    %c0_i32_0 = arith.constant 0 : i32
    %c0_i32_1 = arith.constant 0 : i32
    return %c0_i32, %c0_i32_0 : i32, i32
  }
  func.func @transform_5(%arg0: i32, %arg1: i32) -> (i32, i32) {
    %c0_i32 = arith.constant 0 : i32
    %c0_i32_0 = arith.constant 0 : i32
    return %arg1, %c0_i32 : i32, i32
  }
  func.func @transform_6(%arg0: i32, %arg1: i32) -> (i32, i32, i32) {
    %c0_i32 = arith.constant 0 : i32
    %c0_i32_0 = arith.constant 0 : i32
    %c0_i32_1 = arith.constant 0 : i32
    return %arg0, %c0_i32, %c0_i32_0 : i32, i32, i32
  }
}

</mosaic_0001>

<llo_original>
// kernel: covid_effnet_forward.1
$region0: #{covid_effnet_forward.1}
  #allocation0 [shape = 'u32[]', space=smem, size = 0x4, offset = 0x4, fixed_abs, tag = 'smem constant byte address 0x4 - core index']
  #allocation1 [shape = 'u32[144,128]{1,0:T(1,128)}', space=vmem, size = 0x12000, scoped, tag = 'internal scratch']
  %s0 = inlined_call_operand.vmem [shape: bf16[2,1,16,402], index: 0, kind: input, shape index: {}]
  %s1 = inlined_call_operand.vmem [shape: bf16[4,32,16], index: 1, kind: input, shape index: {}]
  %s2 = inlined_call_operand.vmem [shape: f32[32,1], index: 2, kind: input, shape index: {}]
  %s3 = inlined_call_operand.vmem [shape: bf16[128,32], index: 3, kind: input, shape index: {}]
  %s4 = inlined_call_operand.vmem [shape: f32[128,1], index: 4, kind: input, shape index: {}]
  %s5 = inlined_call_operand.vmem [shape: bf16[384,1], index: 5, kind: input, shape index: {}]
  %s6 = inlined_call_operand.vmem [shape: f32[2,128,1], index: 6, kind: output, shape index: {}]
  %s7 = sld [smem:[#allocation0]]
  $region65: #{covid_effnet_forward.1} parent=0
    _
  %s9 = ssub.s32 1, %s7
  %s10 = scalar_select 0, %s9, %s7
  loop: start=0, step=1, limit=4
  $region2: #{covid_effnet_forward.1} parent=0 // loop_pre_header
    _
  $region3: #{covid_effnet_forward.1} parent=0 // loop_header
    %s12 = sphi 0, %s16
    %p13 = scmp.ge.s32.totalorder %s12, 4
    %s19 = sphi 0, %s31
    %s20 = sphi 0, %s27
    %s21 = sphi 0, %s19
    %s22 = sphi 0, %s20
    %s23 = sphi 0, %s21
    %s24 = sphi 0, %s22
    %s36 = sphi 0, %s38
    %s39 = sphi 0, %s36
    %s40 = sphi 0, %s39
    %s56 = sphi 0, %s40
    %s60 = sphi 0, %s60
    %s62 = sphi 0, %s60
    %s63 = sphi 0, %s62
    %s77 = sphi 0, %s63
    %s81 = sphi 0, %s81
    %s83 = sphi 0, %s81
    %s84 = sphi 0, %s83
    %s98 = sphi 0, %s84
    %s102 = sphi 0, %s102
    %s104 = sphi 0, %s102
    %s105 = sphi 0, %s104
    %s119 = sphi 0, %s105
    %s123 = sphi 0, %s123
    %s125 = sphi 0, %s123
    %s126 = sphi 0, %s125
    %s140 = sphi 0, %s126
    %s146 = sphi 0, %s148
    %s149 = sphi 0, %s146
    %s150 = sphi 0, %s149
    %s166 = sphi 0, %s150
    %s172 = sphi 0, %s174
    %s175 = sphi 0, %s172
    %s176 = sphi 0, %s175
    %s192 = sphi 0, %s176
  $region4: #{covid_effnet_forward.1} parent=0 // loop_header_branch
    %15 = sbr.rel (%p13) target = $region8
  $region5: #{covid_effnet_forward.1} parent=0 // loop_body
    %s17 = ssub.s32 %s12, 1
    %s18 = ssub.s32 %s12, 2
    %s25 = sadd.s32 1, %s20
    %p26 = scmp.ge.s32.totalorder %s25, 1
    %s27 = scalar_select %p26, 0, %s25
    %s28 = sadd.s32 1, %s19
    %s29 = scalar_select %p26, %s28, %s19
    %p30 = scmp.ge.s32.totalorder %s29, 2
    %s31 = scalar_select %p30, 0, %s29
    %s32 = ssub.s32 %s19, %s31
    %s33 = ssub.s32 %s20, %s27
    %s34 = sor.u32 %s32, %s33
    %p35 = scmp.eq.s32.totalorder %s34, 0
    %s37 = sadd.s32 %s36, 1
    %s38 = scalar_select %p35, %s36, %s37
    %p41 = pneg %p35
    %p42 = scmp.eq.s32.totalorder %s12, 1
    %p43 = por %p41, %p42
    %p44 = scmp.ne.s32.totalorder %s36, %s39
    %p45 = scmp.eq.s32.totalorder %s12, 0
    %p46 = por %p44, %p45
    %p47 = scmp.ne.s32.totalorder %s36, %s39
    %p48 = scmp.eq.s32.totalorder %s17, 1
    %p49 = por %p47, %p48
    %p50 = scmp.ne.s32.totalorder %s39, %s40
    %p51 = scmp.eq.s32.totalorder %s17, 0
    %p52 = por %p50, %p51
    %p53 = scmp.ne.s32.totalorder %s39, %s40
    %p54 = scmp.eq.s32.totalorder %s18, 1
    %p55 = por %p53, %p54
    %p57 = scmp.ne.s32.totalorder %s40, %s56
    %p58 = scmp.eq.s32.totalorder %s18, 0
    %p59 = por %p57, %p58
    %s61 = sadd.s32 %s60, 1
    %p64 = scmp.eq.s32.totalorder %s12, 1
    %p65 = scmp.ne.s32.totalorder %s60, %s62
    %p66 = scmp.eq.s32.totalorder %s12, 0
    %p67 = por %p65, %p66
    %p68 = scmp.ne.s32.totalorder %s60, %s62
    %p69 = scmp.eq.s32.totalorder %s17, 1
    %p70 = por %p68, %p69
    %p71 = scmp.ne.s32.totalorder %s62, %s63
    %p72 = scmp.eq.s32.totalorder %s17, 0
    %p73 = por %p71, %p72
    %p74 = scmp.ne.s32.totalorder %s62, %s63
    %p75 = scmp.eq.s32.totalorder %s18, 1
    %p76 = por %p74, %p75
    %p78 = scmp.ne.s32.totalorder %s63, %s77
    %p79 = scmp.eq.s32.totalorder %s18, 0
    %p80 = por %p78, %p79
    %s82 = sadd.s32 %s81, 1
    %p85 = scmp.eq.s32.totalorder %s12, 1
    %p86 = scmp.ne.s32.totalorder %s81, %s83
    %p87 = scmp.eq.s32.totalorder %s12, 0
    %p88 = por %p86, %p87
    %p89 = scmp.ne.s32.totalorder %s81, %s83
    %p90 = scmp.eq.s32.totalorder %s17, 1
    %p91 = por %p89, %p90
    %p92 = scmp.ne.s32.totalorder %s83, %s84
    %p93 = scmp.eq.s32.totalorder %s17, 0
    %p94 = por %p92, %p93
    %p95 = scmp.ne.s32.totalorder %s83, %s84
    %p96 = scmp.eq.s32.totalorder %s18, 1
    %p97 = por %p95, %p96
    %p99 = scmp.ne.s32.totalorder %s84, %s98
    %p100 = scmp.eq.s32.totalorder %s18, 0
    %p101 = por %p99, %p100
    %s103 = sadd.s32 %s102, 1
    %p106 = scmp.eq.s32.totalorder %s12, 1
    %p107 = scmp.ne.s32.totalorder %s102, %s104
    %p108 = scmp.eq.s32.totalorder %s12, 0
    %p109 = por %p107, %p108
    %p110 = scmp.ne.s32.totalorder %s102, %s104
    %p111 = scmp.eq.s32.totalorder %s17, 1
    %p112 = por %p110, %p111
    %p113 = scmp.ne.s32.totalorder %s104, %s105
    %p114 = scmp.eq.s32.totalorder %s17, 0
    %p115 = por %p113, %p114
    %p116 = scmp.ne.s32.totalorder %s104, %s105
    %p117 = scmp.eq.s32.totalorder %s18, 1
    %p118 = por %p116, %p117
    %p120 = scmp.ne.s32.totalorder %s105, %s119
    %p121 = scmp.eq.s32.totalorder %s18, 0
    %p122 = por %p120, %p121
    %s124 = sadd.s32 %s123, 1
    %p127 = scmp.eq.s32.totalorder %s12, 1
    %p128 = scmp.ne.s32.totalorder %s123, %s125
    %p129 = scmp.eq.s32.totalorder %s12, 0
    %p130 = por %p128, %p129
    %p131 = scmp.ne.s32.totalorder %s123, %s125
    %p132 = scmp.eq.s32.totalorder %s17, 1
    %p133 = por %p131, %p132
    %p134 = scmp.ne.s32.totalorder %s125, %s126
    %p135 = scmp.eq.s32.totalorder %s17, 0
    %p136 = por %p134, %p135
    %p137 = scmp.ne.s32.totalorder %s125, %s126
    %p138 = scmp.eq.s32.totalorder %s18, 1
    %p139 = por %p137, %p138
    %p141 = scmp.ne.s32.totalorder %s126, %s140
    %p142 = scmp.eq.s32.totalorder %s18, 0
    %p143 = por %p141, %p142
    %s144 = ssub.s32 %s20, %s27
    %p145 = scmp.eq.s32.totalorder %s144, 0
    %s147 = sadd.s32 %s146, 1
    %s148 = scalar_select %p145, %s146, %s147
    %p151 = pneg %p145
    %p152 = scmp.eq.s32.totalorder %s12, 1
    %p153 = por %p151, %p152
    %p154 = scmp.ne.s32.totalorder %s146, %s149
    %p155 = scmp.eq.s32.totalorder %s12, 0
    %p156 = por %p154, %p155
    %p157 = scmp.ne.s32.totalorder %s146, %s149
    %p158 = scmp.eq.s32.totalorder %s17, 1
    %p159 = por %p157, %p158
    %p160 = scmp.ne.s32.totalorder %s149, %s150
    %p161 = scmp.eq.s32.totalorder %s17, 0
    %p162 = por %p160, %p161
    %p163 = scmp.ne.s32.totalorder %s149, %s150
    %p164 = scmp.eq.s32.totalorder %s18, 1
    %p165 = por %p163, %p164
    %p167 = scmp.ne.s32.totalorder %s150, %s166
    %p168 = scmp.eq.s32.totalorder %s18, 0
    %p169 = por %p167, %p168
    %s170 = ssub.s32 %s19, %s31
    %p171 = scmp.eq.s32.totalorder %s170, 0
    %s173 = sadd.s32 %s172, 1
    %s174 = scalar_select %p171, %s172, %s173
    %p177 = pneg %p171
    %p178 = scmp.eq.s32.totalorder %s12, 1
    %p179 = por %p177, %p178
    %p180 = scmp.ne.s32.totalorder %s172, %s175
    %p181 = scmp.eq.s32.totalorder %s12, 0
    %p182 = por %p180, %p181
    %p183 = scmp.ne.s32.totalorder %s172, %s175
    %p184 = scmp.eq.s32.totalorder %s17, 1
    %p185 = por %p183, %p184
    %p186 = scmp.ne.s32.totalorder %s175, %s176
    %p187 = scmp.eq.s32.totalorder %s17, 0
    %p188 = por %p186, %p187
    %p189 = scmp.ne.s32.totalorder %s175, %s176
    %p190 = scmp.eq.s32.totalorder %s18, 1
    %p191 = por %p189, %p190
    %p193 = scmp.ne.s32.totalorder %s176, %s192
    %p194 = scmp.eq.s32.totalorder %s18, 0
    %p195 = por %p193, %p194
    %p196 = scmp.le.s32.totalorder 1, %s12
    %p197 = scmp.lt.s32.totalorder %s12, 3
    %p198 = pnand %p196, %p197
    %p199 = pneg %p198
    // Predicated region
    $region9: #{covid_effnet_forward.1} parent=5 // pred_check
      _
    $region10: #{covid_effnet_forward.1} parent=5 // pred_check_branch
      %201 = sbr.rel (%p198) target = $region12
    $region11: #{covid_effnet_forward.1} parent=5 // pred_region
      %s202 = ssub.s32 %s12, 1
      // Predicated region
      $region13: #{covid_effnet_forward.1} parent=11 // pred_check
        %p203 = pneg %p73
      $region14: #{covid_effnet_forward.1} parent=11 // pred_check_branch
        %205 = sbr.rel (%p203) target = $region16
      $region15: #{covid_effnet_forward.1} parent=11 // pred_region
        _
      $region16: #{covid_effnet_forward.1} parent=11 // pred_fallthru
        _
      // Predicated region
      $region17: #{covid_effnet_forward.1} parent=11 // pred_check
        %p206 = pneg %p94
      $region18: #{covid_effnet_forward.1} parent=11 // pred_check_branch
        %208 = sbr.rel (%p206) target = $region20
      $region19: #{covid_effnet_forward.1} parent=11 // pred_region
        _
      $region20: #{covid_effnet_forward.1} parent=11 // pred_fallthru
        _
      // Predicated region
      $region21: #{covid_effnet_forward.1} parent=11 // pred_check
        %p209 = pneg %p115
      $region22: #{covid_effnet_forward.1} parent=11 // pred_check_branch
        %211 = sbr.rel (%p209) target = $region24
      $region23: #{covid_effnet_forward.1} parent=11 // pred_region
        _
      $region24: #{covid_effnet_forward.1} parent=11 // pred_fallthru
        _
      // Predicated region
      $region25: #{covid_effnet_forward.1} parent=11 // pred_check
        %p212 = pneg %p136
      $region26: #{covid_effnet_forward.1} parent=11 // pred_check_branch
        %214 = sbr.rel (%p212) target = $region28
      $region27: #{covid_effnet_forward.1} parent=11 // pred_region
        _
      $region28: #{covid_effnet_forward.1} parent=11 // pred_fallthru
        _
      // Predicated region
      $region29: #{covid_effnet_forward.1} parent=11 // pred_check
        %p215 = pneg %p162
      $region30: #{covid_effnet_forward.1} parent=11 // pred_check_branch
        %217 = sbr.rel (%p215) target = $region32
      $region31: #{covid_effnet_forward.1} parent=11 // pred_region
        %s218 = smul.u32 48, %s22
        %p219 = scmp.lt.s32.totalorder %s218, 47
        %s220 = scalar_select %p219, %s218, 47
        %s221 = smul.addr %s220, 4
        %s222 = scalar_lea.vmem %s5, %s221
        %s223 = smul.u32 48, %s22
      $region32: #{covid_effnet_forward.1} parent=11 // pred_fallthru
        _
    $region12: #{covid_effnet_forward.1} parent=5 // pred_fallthru
      _
    %p224 = scmp.lt.s32.totalorder %s12, 2
    // Predicated region
    $region33: #{covid_effnet_forward.1} parent=5 // pred_check
      %p225 = pneg %p224
    $region34: #{covid_effnet_forward.1} parent=5 // pred_check_branch
      %227 = sbr.rel (%p225) target = $region36
    $region35: #{covid_effnet_forward.1} parent=5 // pred_region
      // Predicated region
      $region37: #{covid_effnet_forward.1} parent=35 // pred_check
        %p228 = pneg %p46
      $region38: #{covid_effnet_forward.1} parent=35 // pred_check_branch
        %230 = sbr.rel (%p228) target = $region40
      $region39: #{covid_effnet_forward.1} parent=35 // pred_region
        %p231 = scmp.lt.s32.totalorder %s19, 1
        %s232 = scalar_select %p231, %s19, 1
        %p233 = scmp.lt.s32.totalorder %s20, 0
        %s234 = scalar_select %p233, %s20, 0
        %s235 = smul.addr %s234, 8
        %s236 = smul.addr %s232, 8
        %s237 = sadd.s32 %s235, %s236
        %s238 = smul.addr %s237, 4
        %s239 = scalar_lea.vmem %s0, %s238
      $region40: #{covid_effnet_forward.1} parent=35 // pred_fallthru
        _
    $region36: #{covid_effnet_forward.1} parent=5 // pred_fallthru
      _
    %p240 = scmp.le.s32.totalorder 1, %s12
    %p241 = scmp.lt.s32.totalorder %s12, 3
    %p242 = pnand %p240, %p241
    %p243 = pneg %p242
    // Predicated region
    $region41: #{covid_effnet_forward.1} parent=5 // pred_check
      _
    $region42: #{covid_effnet_forward.1} parent=5 // pred_check_branch
      %245 = sbr.rel (%p242) target = $region44
    $region43: #{covid_effnet_forward.1} parent=5 // pred_region
      %s246 = ssub.s32 %s12, 1
      %p247 = scmp.lt.s32.totalorder %s21, 1
      %s248 = scalar_select %p247, %s21, 1
      %p249 = scmp.lt.s32.totalorder %s22, 0
      %s250 = scalar_select %p249, %s22, 0
      %s251 = smul.addr %s250, 8
      %s252 = smul.addr %s248, 8
      %s253 = sadd.s32 %s251, %s252
      %s254 = smul.addr %s253, 4
      %s255 = scalar_lea.vmem %s0, %s254
      %p256 = pneg %p52
      %p257 = pneg %p49
      %p258 = pneg %p73
      %p259 = pneg %p70
      %p260 = pneg %p94
      %p261 = pneg %p91
      %p262 = pneg %p115
      %p263 = pneg %p112
      %p264 = pneg %p136
      %p265 = pneg %p133
      %s266 = smul.u32 48, %s22
      %p267 = scmp.lt.s32.totalorder %s266, 47
      %s268 = scalar_select %p267, %s266, 47
      %s269 = smul.addr %s268, 4
      %s270 = scalar_lea.vmem %s5, %s269
      %p271 = pneg %p162
      %p272 = pneg %p159
      %p273 = pneg %p188
      %p274 = pneg %p185
      %p275 = scmp.lt.s32.totalorder %s21, 1
      %s276 = scalar_select %p275, %s21, 1
      %s277 = smul.addr %s276, 16
      %s278 = smul.addr %s277, 8
      %s279 = scalar_lea.vmem %s6, %s278
      %p280 = scmp.lt.s32.totalorder %s21, 1
      %s281 = scalar_select %p280, %s21, 1
      %p282 = scmp.lt.s32.totalorder %s22, 0
      %s283 = scalar_select %p282, %s22, 0
      %s284 = smul.addr %s283, 8
      %s285 = smul.addr %s281, 8
      %s286 = sadd.s32 %s284, %s285
      %s287 = smul.addr %s286, 4
      %s288 = scalar_lea.vmem %s0, %s287
      %s289 = smul.u32 48, %s22
      %p290 = scmp.lt.s32.totalorder %s289, 47
      %s291 = scalar_select %p290, %s289, 47
      %s292 = smul.addr %s291, 4
      %s293 = scalar_lea.vmem %s5, %s292
      %s294 = smul.u32 48, %s22
      %p295 = scmp.lt.s32.totalorder %s21, 1
      %s296 = scalar_select %p295, %s21, 1
      %s297 = smul.addr %s296, 16
      %s298 = smul.addr %s297, 8
      %s299 = scalar_lea.vmem %s6, %s298
      %p301 = scmp.eq.s32.totalorder %s22, 0
      // Predicated region
      $region45: #{covid_effnet_forward.1} parent=43 // pred_check
        %p302 = pneg %p301
      $region46: #{covid_effnet_forward.1} parent=43 // pred_check_branch
        %304 = sbr.rel (%p302) target = $region48
      $region47: #{covid_effnet_forward.1} parent=43 // pred_region
        %vm305 = vcmask 7168
        %306 = vst.msk [vmem:[%s299] sm:$0xff] %vm305, 0.0
        %307 = vst.msk [vmem:[%s299 + $0x8] sm:$0xff] %vm305, 0.0
        %308 = vst.msk [vmem:[%s299 + $0x10] sm:$0xff] %vm305, 0.0
        %309 = vst.msk [vmem:[%s299 + $0x18] sm:$0xff] %vm305, 0.0
        %310 = vst.msk [vmem:[%s299 + $0x20] sm:$0xff] %vm305, 0.0
        %311 = vst.msk [vmem:[%s299 + $0x28] sm:$0xff] %vm305, 0.0
        %312 = vst.msk [vmem:[%s299 + $0x30] sm:$0xff] %vm305, 0.0
        %313 = vst.msk [vmem:[%s299 + $0x38] sm:$0xff] %vm305, 0.0
        %314 = vst.msk [vmem:[%s299 + $0x40] sm:$0xff] %vm305, 0.0
        %315 = vst.msk [vmem:[%s299 + $0x48] sm:$0xff] %vm305, 0.0
        %316 = vst.msk [vmem:[%s299 + $0x50] sm:$0xff] %vm305, 0.0
        %317 = vst.msk [vmem:[%s299 + $0x58] sm:$0xff] %vm305, 0.0
        %318 = vst.msk [vmem:[%s299 + $0x60] sm:$0xff] %vm305, 0.0
        %319 = vst.msk [vmem:[%s299 + $0x68] sm:$0xff] %vm305, 0.0
        %320 = vst.msk [vmem:[%s299 + $0x70] sm:$0xff] %vm305, 0.0
        %321 = vst.msk [vmem:[%s299 + $0x78] sm:$0xff] %vm305, 0.0
      $region48: #{covid_effnet_forward.1} parent=43 // pred_fallthru
        _
      %v322 = vld [vmem:[%s1] sm:$0xf]
      %v323 = vld [vmem:[%s1 + $0x4] sm:$0xf]
      %v324 = vld [vmem:[%s1 + $0x8] sm:$0xf]
      %v325 = vld [vmem:[%s1 + $0xc] sm:$0xf]
      %v326 = vld [vmem:[%s288] sm:$0xff]
      %v327 = vld [vmem:[%s288 + $0x8] sm:$0xf]
      %v328 = vld [vmem:[%s288 + $0x10] sm:$0xff]
      %v329 = vld [vmem:[%s288 + $0x18] sm:$0xf]
      %s330 = scalar_lea.vmem %s1, 16
      %v331 = vld [vmem:[%s330] sm:$0xf]
      %v332 = vld [vmem:[%s330 + $0x4] sm:$0xf]
      %v333 = vld [vmem:[%s330 + $0x8] sm:$0xf]
      %v334 = vld [vmem:[%s330 + $0xc] sm:$0xf]
      %v335 = vld [vmem:[%s288 + $0x8] sm:$0xff]
      %v336 = vld [vmem:[%s288 + $0x18] sm:$0xff]
      %v341 = vunpack.c.l.b16 %v331
      %v342 = vunpack.c.l.b16 %v332
      %v343 = vunpack.c.l.b16 %v333
      %v344 = vunpack.c.l.b16 %v334
      %v345 = vpack.c.b16 %v342, %v341
      %v346 = vpack.c.b16 %v344, %v343
      %v351 = vunpack.c.l.b16 %v326
      %v352 = vunpack.c.h.b16 %v326
      %v353 = vunpack.c.l.b16 %v335
      %v354 = vunpack.c.h.b16 %v335
      %v355 = vunpack.c.l.b16 %v328
      %v356 = vunpack.c.h.b16 %v328
      %v357 = vunpack.c.l.b16 %v336
      %v358 = vunpack.c.h.b16 %v336
      %v359 = vpack.c.b16 %v355, %v351
      %v360 = vpack.c.b16 %v356, %v352
      %v361 = vpack.c.b16 %v357, %v353
      %v362 = vpack.c.b16 %v358, %v354
      %363 = vrot.lane.b32.xlu0 %v359, 127
      %v364 = vpop.permute.xlu0 %363
      %365 = vrot.lane.b32.xlu0 %v360, 127
      %v366 = vpop.permute.xlu0 %365
      %367 = vrot.lane.b32.xlu0 %v361, 127
      %v368 = vpop.permute.xlu0 %367
      %369 = vrot.lane.b32.xlu0 %v362, 127
      %v370 = vpop.permute.xlu0 %369
      %vm371 = vcmask 1039360
      %v372 = vsel %vm371, %v364, %v366
      %v373 = vsel %vm371, %v366, %v368
      %v374 = vsel %vm371, %v368, %v370
      %vm378 = vcmask 130048
      %v380 = vsel %vm378, %v345, 0
      %v383 = vsel %vm378, %v346, 0
      %385 = vmatprep.subr.bf16.mxu0 %v373
      %386 = vmatpush1.bf16.msra.mxu0 %v372
      %387 = vmatprep.subr.bf16.mxu0 0
      %388 = vmatpush1.bf16.msra.mxu0 0
      %389 = vmatprep.subr.bf16.mxu0 0
      %390 = vmatpush1.bf16.msra.mxu0 0
      %391 = vmatprep.subr.bf16.mxu0 0
      %392 = vmatpush1.bf16.msra.mxu0 0
      %393 = vmatprep.subr.bf16.mxu0 0
      %394 = vmatpush1.bf16.msra.mxu0 0
      %395 = vmatprep.subr.bf16.mxu0 0
      %396 = vmatpush1.bf16.msra.mxu0 0
      %397 = vmatprep.subr.bf16.mxu0 0
      %398 = vmatpush1.bf16.msra.mxu0 0
      %399 = vmatprep.subr.bf16.mxu0 0
      %400 = vmatpush1.bf16.msra.mxu0 0
      %401 = vmatprep.subr.bf16.mxu0 0
      %402 = vmatpush1.bf16.msra.mxu0 0
      %403 = vmatprep.subr.bf16.mxu0 0
      %404 = vmatpush1.bf16.msra.mxu0 0
      %405 = vmatprep.subr.bf16.mxu0 0
      %406 = vmatpush1.bf16.msra.mxu0 0
      %407 = vmatprep.subr.bf16.mxu0 0
      %408 = vmatpush1.bf16.msra.mxu0 0
      %409 = vmatprep.subr.bf16.mxu0 0
      %410 = vmatpush1.bf16.msra.mxu0 0
      %411 = vmatprep.subr.bf16.mxu0 0
      %412 = vmatpush1.bf16.msra.mxu0 0
      %413 = vmatprep.subr.bf16.mxu0 0
      %414 = vmatpush1.bf16.msra.mxu0 0
      %415 = vmatprep.subr.bf16.mxu0 0
      %416 = vmatpush1.bf16.msra.mxu0 0
      %417 = vmatprep.mubr.bf16.mxu0 0
      %418 = vmatmul.mubr.bf16.gmra.mrb[0].mxu0 %v380
      %v419 = vpop.f32.mrb[0].mxu0
      %v420 = vadd.f32 0.0, %v419
      %v421 = vpop.f32.mrb[0].mxu0
      %v422 = vadd.f32 0.0, %v421
      %v423 = vpop.f32.mrb[0].mxu0
      %v424 = vadd.f32 0.0, %v423
      %v425 = vpop.f32.mrb[0].mxu0
      %v426 = vadd.f32 0.0, %v425
      %427 = vmatprep.mubr.bf16.mxu0 0
      %428 = vmatmul.mubr.bf16.gmra.mrb[0].mxu0 %v383
      %v429 = vpop.f32.mrb[0].mxu0
      %v430 = vadd.f32 0.0, %v429
      %v431 = vpop.f32.mrb[0].mxu0
      %v432 = vadd.f32 0.0, %v431
      %v433 = vpop.f32.mrb[0].mxu0
      %v434 = vadd.f32 0.0, %v433
      %v435 = vpop.f32.mrb[0].mxu0
      %v436 = vadd.f32 0.0, %v435
      %437 = vdwg.mxu0
      %438 = vmatprep.subr.bf16.mxu0 0
      %439 = vmatpush1.bf16.msra.mxu0 %v374
      %440 = vmatprep.subr.bf16.mxu0 0
      %441 = vmatpush1.bf16.msra.mxu0 0
      %442 = vmatprep.subr.bf16.mxu0 0
      %443 = vmatpush1.bf16.msra.mxu0 0
      %444 = vmatprep.subr.bf16.mxu0 0
      %445 = vmatpush1.bf16.msra.mxu0 0
      %446 = vmatprep.subr.bf16.mxu0 0
      %447 = vmatpush1.bf16.msra.mxu0 0
      %448 = vmatprep.subr.bf16.mxu0 0
      %449 = vmatpush1.bf16.msra.mxu0 0
      %450 = vmatprep.subr.bf16.mxu0 0
      %451 = vmatpush1.bf16.msra.mxu0 0
      %452 = vmatprep.subr.bf16.mxu0 0
      %453 = vmatpush1.bf16.msra.mxu0 0
      %454 = vmatprep.subr.bf16.mxu0 0
      %455 = vmatpush1.bf16.msra.mxu0 0
      %456 = vmatprep.subr.bf16.mxu0 0
      %457 = vmatpush1.bf16.msra.mxu0 0
      %458 = vmatprep.subr.bf16.mxu0 0
      %459 = vmatpush1.bf16.msra.mxu0 0
      %460 = vmatprep.subr.bf16.mxu0 0
      %461 = vmatpush1.bf16.msra.mxu0 0
      %462 = vmatprep.subr.bf16.mxu0 0
      %463 = vmatpush1.bf16.msra.mxu0 0
      %464 = vmatprep.subr.bf16.mxu0 0
      %465 = vmatpush1.bf16.msra.mxu0 0
      %466 = vmatprep.subr.bf16.mxu0 0
      %467 = vmatpush1.bf16.msra.mxu0 0
      %468 = vmatprep.subr.bf16.mxu0 0
      %469 = vmatpush1.bf16.msra.mxu0 0
      %470 = vmatprep.mubr.bf16.mxu0 0
      %471 = vmatmul.mubr.bf16.gmra.mrb[0].mxu0 %v380
      %v472 = vpop.f32.mrb[0].mxu0
      %v473 = vadd.f32 0.0, %v472
      %v474 = vpop.f32.mrb[0].mxu0
      %v475 = vpop.f32.mrb[0].mxu0
      %v476 = vadd.f32 0.0, %v475
      %v477 = vpop.f32.mrb[0].mxu0
      %478 = vmatprep.mubr.bf16.mxu0 0
      %479 = vmatmul.mubr.bf16.gmra.mrb[0].mxu0 %v383
      %v480 = vpop.f32.mrb[0].mxu0
      %v481 = vadd.f32 0.0, %v480
      %v482 = vpop.f32.mrb[0].mxu0
      %v483 = vpop.f32.mrb[0].mxu0
      %v484 = vadd.f32 0.0, %v483
      %v485 = vpop.f32.mrb[0].mxu0
      %486 = vdwg.mxu0
      %v491 = vunpack.c.l.b16 %v322
      %v492 = vunpack.c.l.b16 %v323
      %v493 = vunpack.c.l.b16 %v324
      %v494 = vunpack.c.l.b16 %v325
      %v495 = vpack.c.b16 %v492, %v491
      %v496 = vpack.c.b16 %v494, %v493
      %v499 = vunpack.c.l.b16 %v327
      %v500 = vunpack.c.l.b16 %v329
      %v501 = vpack.c.b16 %v500, %v499
      %v506 = vsel %vm378, %v495, 0
      %v509 = vsel %vm378, %v496, 0
      %511 = vmatprep.subr.bf16.mxu0 %v360
      %512 = vmatpush1.bf16.msra.mxu0 %v359
      %513 = vmatprep.subr.bf16.mxu0 0
      %514 = vmatpush1.bf16.msra.mxu0 0
      %515 = vmatprep.subr.bf16.mxu0 0
      %516 = vmatpush1.bf16.msra.mxu0 0
      %517 = vmatprep.subr.bf16.mxu0 0
      %518 = vmatpush1.bf16.msra.mxu0 0
      %519 = vmatprep.subr.bf16.mxu0 0
      %520 = vmatpush1.bf16.msra.mxu0 0
      %521 = vmatprep.subr.bf16.mxu0 0
      %522 = vmatpush1.bf16.msra.mxu0 0
      %523 = vmatprep.subr.bf16.mxu0 0
      %524 = vmatpush1.bf16.msra.mxu0 0
      %525 = vmatprep.subr.bf16.mxu0 0
      %526 = vmatpush1.bf16.msra.mxu0 0
      %527 = vmatprep.subr.bf16.mxu0 0
      %528 = vmatpush1.bf16.msra.mxu0 0
      %529 = vmatprep.subr.bf16.mxu0 0
      %530 = vmatpush1.bf16.msra.mxu0 0
      %531 = vmatprep.subr.bf16.mxu0 0
      %532 = vmatpush1.bf16.msra.mxu0 0
      %533 = vmatprep.subr.bf16.mxu0 0
      %534 = vmatpush1.bf16.msra.mxu0 0
      %535 = vmatprep.subr.bf16.mxu0 0
      %536 = vmatpush1.bf16.msra.mxu0 0
      %537 = vmatprep.subr.bf16.mxu0 0
      %538 = vmatpush1.bf16.msra.mxu0 0
      %539 = vmatprep.subr.bf16.mxu0 0
      %540 = vmatpush1.bf16.msra.mxu0 0
      %541 = vmatprep.subr.bf16.mxu0 0
      %542 = vmatpush1.bf16.msra.mxu0 0
      %543 = vmatprep.mubr.bf16.mxu0 0
      %544 = vmatmul.mubr.bf16.gmra.mrb[0].mxu0 %v506
      %v545 = vpop.f32.mrb[0].mxu0
      %v546 = vadd.f32 %v420, %v545
      %v547 = vpop.f32.mrb[0].mxu0
      %v548 = vadd.f32 %v422, %v547
      %v549 = vpop.f32.mrb[0].mxu0
      %v550 = vadd.f32 %v424, %v549
      %v551 = vpop.f32.mrb[0].mxu0
      %v552 = vadd.f32 %v426, %v551
      %553 = vmatprep.mubr.bf16.mxu0 0
      %554 = vmatmul.mubr.bf16.gmra.mrb[0].mxu0 %v509
      %v555 = vpop.f32.mrb[0].mxu0
      %v556 = vadd.f32 %v430, %v555
      %v557 = vpop.f32.mrb[0].mxu0
      %v558 = vadd.f32 %v432, %v557
      %v559 = vpop.f32.mrb[0].mxu0
      %v560 = vadd.f32 %v434, %v559
      %v561 = vpop.f32.mrb[0].mxu0
      %v562 = vadd.f32 %v436, %v561
      %563 = vdwg.mxu0
      %564 = vmatprep.subr.bf16.mxu0 0
      %565 = vmatpush1.bf16.msra.mxu0 %v501
      %566 = vmatprep.subr.bf16.mxu0 0
      %567 = vmatpush1.bf16.msra.mxu0 0
      %568 = vmatprep.subr.bf16.mxu0 0
      %569 = vmatpush1.bf16.msra.mxu0 0
      %570 = vmatprep.subr.bf16.mxu0 0
      %571 = vmatpush1.bf16.msra.mxu0 0
      %572 = vmatprep.subr.bf16.mxu0 0
      %573 = vmatpush1.bf16.msra.mxu0 0
      %574 = vmatprep.subr.bf16.mxu0 0
      %575 = vmatpush1.bf16.msra.mxu0 0
      %576 = vmatprep.subr.bf16.mxu0 0
      %577 = vmatpush1.bf16.msra.mxu0 0
      %578 = vmatprep.subr.bf16.mxu0 0
      %579 = vmatpush1.bf16.msra.mxu0 0
      %580 = vmatprep.subr.bf16.mxu0 0
      %581 = vmatpush1.bf16.msra.mxu0 0
      %582 = vmatprep.subr.bf16.mxu0 0
      %583 = vmatpush1.bf16.msra.mxu0 0
      %584 = vmatprep.subr.bf16.mxu0 0
      %585 = vmatpush1.bf16.msra.mxu0 0
      %586 = vmatprep.subr.bf16.mxu0 0
      %587 = vmatpush1.bf16.msra.mxu0 0
      %588 = vmatprep.subr.bf16.mxu0 0
      %589 = vmatpush1.bf16.msra.mxu0 0
      %590 = vmatprep.subr.bf16.mxu0 0
      %591 = vmatpush1.bf16.msra.mxu0 0
      %592 = vmatprep.subr.bf16.mxu0 0
      %593 = vmatpush1.bf16.msra.mxu0 0
      %594 = vmatprep.subr.bf16.mxu0 0
      %595 = vmatpush1.bf16.msra.mxu0 0
      %596 = vmatprep.mubr.bf16.mxu0 0
      %597 = vmatmul.mubr.bf16.gmra.mrb[0].mxu0 %v506
      %v598 = vpop.f32.mrb[0].mxu0
      %v599 = vadd.f32 %v473, %v598
      %v600 = vpop.f32.mrb[0].mxu0
      %v601 = vpop.f32.mrb[0].mxu0
      %v602 = vadd.f32 %v476, %v601
      %v603 = vpop.f32.mrb[0].mxu0
      %604 = vmatprep.mubr.bf16.mxu0 0
      %605 = vmatmul.mubr.bf16.gmra.mrb[0].mxu0 %v509
      %v606 = vpop.f32.mrb[0].mxu0
      %v607 = vadd.f32 %v481, %v606
      %v608 = vpop.f32.mrb[0].mxu0
      %v609 = vpop.f32.mrb[0].mxu0
      %v610 = vadd.f32 %v484, %v609
      %v611 = vpop.f32.mrb[0].mxu0
      %612 = vdwg.mxu0
      %s613 = scalar_lea.vmem %s1, 32
      %v614 = vld [vmem:[%s613] sm:$0xf]
      %v615 = vld [vmem:[%s613 + $0x4] sm:$0xf]
      %v616 = vld [vmem:[%s613 + $0x8] sm:$0xf]
      %v617 = vld [vmem:[%s613 + $0xc] sm:$0xf]
      %v622 = vunpack.c.l.b16 %v614
      %v623 = vunpack.c.l.b16 %v615
      %v624 = vunpack.c.l.b16 %v616
      %v625 = vunpack.c.l.b16 %v617
      %v626 = vpack.c.b16 %v623, %v622
      %v627 = vpack.c.b16 %v625, %v624
      %628 = vrot.lane.b32.xlu0 %v359, 111
      %v629 = vpop.permute.xlu0 %628
      %630 = vrot.lane.b32.xlu0 %v360, 111
      %v631 = vpop.permute.xlu0 %630
      %632 = vrot.lane.b32.xlu0 %v361, 111
      %v633 = vpop.permute.xlu0 %632
      %634 = vrot.lane.b32.xlu0 %v362, 111
      %v635 = vpop.permute.xlu0 %634
      %vm636 = vcmask 908288
      %v637 = vsel %vm636, %v629, %v631
      %v638 = vsel %vm636, %v631, %v633
      %v639 = vsel %vm636, %v633, %v635
      %v644 = vsel %vm378, %v626, 0
      %v647 = vsel %vm378, %v627, 0
      %649 = vmatprep.subr.bf16.mxu0 %v638
      %650 = vmatpush1.bf16.msra.mxu0 %v637
      %651 = vmatprep.subr.bf16.mxu0 0
      %652 = vmatpush1.bf16.msra.mxu0 0
      %653 = vmatprep.subr.bf16.mxu0 0
      %654 = vmatpush1.bf16.msra.mxu0 0
      %655 = vmatprep.subr.bf16.mxu0 0
      %656 = vmatpush1.bf16.msra.mxu0 0
      %657 = vmatprep.subr.bf16.mxu0 0
      %658 = vmatpush1.bf16.msra.mxu0 0
      %659 = vmatprep.subr.bf16.mxu0 0
      %660 = vmatpush1.bf16.msra.mxu0 0
      %661 = vmatprep.subr.bf16.mxu0 0
      %662 = vmatpush1.bf16.msra.mxu0 0
      %663 = vmatprep.subr.bf16.mxu0 0
      %664 = vmatpush1.bf16.msra.mxu0 0
      %665 = vmatprep.subr.bf16.mxu0 0
      %666 = vmatpush1.bf16.msra.mxu0 0
      %667 = vmatprep.subr.bf16.mxu0 0
      %668 = vmatpush1.bf16.msra.mxu0 0
      %669 = vmatprep.subr.bf16.mxu0 0
      %670 = vmatpush1.bf16.msra.mxu0 0
      %671 = vmatprep.subr.bf16.mxu0 0
      %672 = vmatpush1.bf16.msra.mxu0 0
      %673 = vmatprep.subr.bf16.mxu0 0
      %674 = vmatpush1.bf16.msra.mxu0 0
      %675 = vmatprep.subr.bf16.mxu0 0
      %676 = vmatpush1.bf16.msra.mxu0 0
      %677 = vmatprep.subr.bf16.mxu0 0
      %678 = vmatpush1.bf16.msra.mxu0 0
      %679 = vmatprep.subr.bf16.mxu0 0
      %680 = vmatpush1.bf16.msra.mxu0 0
      %681 = vmatprep.mubr.bf16.mxu0 0
      %682 = vmatmul.mubr.bf16.gmra.mrb[0].mxu0 %v644
      %v683 = vpop.f32.mrb[0].mxu0
      %v684 = vadd.f32 0.0, %v683
      %v685 = vpop.f32.mrb[0].mxu0
      %v686 = vadd.f32 0.0, %v685
      %v687 = vpop.f32.mrb[0].mxu0
      %v688 = vadd.f32 0.0, %v687
      %v689 = vpop.f32.mrb[0].mxu0
      %v690 = vadd.f32 0.0, %v689
      %691 = vmatprep.mubr.bf16.mxu0 0
      %692 = vmatmul.mubr.bf16.gmra.mrb[0].mxu0 %v647
      %v693 = vpop.f32.mrb[0].mxu0
      %v694 = vadd.f32 0.0, %v693
      %v695 = vpop.f32.mrb[0].mxu0
      %v696 = vadd.f32 0.0, %v695
      %v697 = vpop.f32.mrb[0].mxu0
      %v698 = vadd.f32 0.0, %v697
      %v699 = vpop.f32.mrb[0].mxu0
      %v700 = vadd.f32 0.0, %v699
      %701 = vdwg.mxu0
      %702 = vmatprep.subr.bf16.mxu0 0
      %703 = vmatpush1.bf16.msra.mxu0 %v639
      %704 = vmatprep.subr.bf16.mxu0 0
      %705 = vmatpush1.bf16.msra.mxu0 0
      %706 = vmatprep.subr.bf16.mxu0 0
      %707 = vmatpush1.bf16.msra.mxu0 0
      %708 = vmatprep.subr.bf16.mxu0 0
      %709 = vmatpush1.bf16.msra.mxu0 0
      %710 = vmatprep.subr.bf16.mxu0 0
      %711 = vmatpush1.bf16.msra.mxu0 0
      %712 = vmatprep.subr.bf16.mxu0 0
      %713 = vmatpush1.bf16.msra.mxu0 0
      %714 = vmatprep.subr.bf16.mxu0 0
      %715 = vmatpush1.bf16.msra.mxu0 0
      %716 = vmatprep.subr.bf16.mxu0 0
      %717 = vmatpush1.bf16.msra.mxu0 0
      %718 = vmatprep.subr.bf16.mxu0 0
      %719 = vmatpush1.bf16.msra.mxu0 0
      %720 = vmatprep.subr.bf16.mxu0 0
      %721 = vmatpush1.bf16.msra.mxu0 0
      %722 = vmatprep.subr.bf16.mxu0 0
      %723 = vmatpush1.bf16.msra.mxu0 0
      %724 = vmatprep.subr.bf16.mxu0 0
      %725 = vmatpush1.bf16.msra.mxu0 0
      %726 = vmatprep.subr.bf16.mxu0 0
      %727 = vmatpush1.bf16.msra.mxu0 0
      %728 = vmatprep.subr.bf16.mxu0 0
      %729 = vmatpush1.bf16.msra.mxu0 0
      %730 = vmatprep.subr.bf16.mxu0 0
      %731 = vmatpush1.bf16.msra.mxu0 0
      %732 = vmatprep.subr.bf16.mxu0 0
      %733 = vmatpush1.bf16.msra.mxu0 0
      %734 = vmatprep.mubr.bf16.mxu0 0
      %735 = vmatmul.mubr.bf16.gmra.mrb[0].mxu0 %v644
      %v736 = vpop.f32.mrb[0].mxu0
      %v737 = vadd.f32 0.0, %v736
      %v738 = vpop.f32.mrb[0].mxu0
      %v739 = vpop.f32.mrb[0].mxu0
      %v740 = vadd.f32 0.0, %v739
      %v741 = vpop.f32.mrb[0].mxu0
      %742 = vmatprep.mubr.bf16.mxu0 0
      %743 = vmatmul.mubr.bf16.gmra.mrb[0].mxu0 %v647
      %v744 = vpop.f32.mrb[0].mxu0
      %v745 = vadd.f32 0.0, %v744
      %v746 = vpop.f32.mrb[0].mxu0
      %v747 = vpop.f32.mrb[0].mxu0
      %v748 = vadd.f32 0.0, %v747
      %v749 = vpop.f32.mrb[0].mxu0
      %750 = vdwg.mxu0
      %v751 = vadd.f32 %v546, %v684
      %v752 = vadd.f32 %v548, %v686
      %v753 = vadd.f32 %v599, %v737
      %v754 = vadd.f32 %v550, %v688
      %v755 = vadd.f32 %v552, %v690
      %v756 = vadd.f32 %v602, %v740
      %v757 = vadd.f32 %v556, %v694
      %v758 = vadd.f32 %v558, %v696
      %v759 = vadd.f32 %v607, %v745
      %v760 = vadd.f32 %v560, %v698
      %v761 = vadd.f32 %v562, %v700
      %v762 = vadd.f32 %v610, %v748
      %s763 = scalar_lea.vmem %s1, 48
      %v764 = vld [vmem:[%s763] sm:$0xf]
      %v765 = vld [vmem:[%s763 + $0x4] sm:$0xf]
      %v766 = vld [vmem:[%s763 + $0x8] sm:$0xf]
      %v767 = vld [vmem:[%s763 + $0xc] sm:$0xf]
      %v772 = vunpack.c.l.b16 %v764
      %v773 = vunpack.c.l.b16 %v765
      %v774 = vunpack.c.l.b16 %v766
      %v775 = vunpack.c.l.b16 %v767
      %v776 = vpack.c.b16 %v773, %v772
      %v777 = vpack.c.b16 %v775, %v774
      %778 = vrot.lane.b32.xlu0 %v359, 110
      %v779 = vpop.permute.xlu0 %778
      %780 = vrot.lane.b32.xlu0 %v360, 110
      %v781 = vpop.permute.xlu0 %780
      %782 = vrot.lane.b32.xlu0 %v361, 110
      %v783 = vpop.permute.xlu0 %782
      %784 = vrot.lane.b32.xlu0 %v362, 110
      %v785 = vpop.permute.xlu0 %784
      %vm786 = vcmask 900096
      %v787 = vsel %vm786, %v779, %v781
      %v788 = vsel %vm786, %v781, %v783
      %v789 = vsel %vm786, %v783, %v785
      %v794 = vsel %vm378, %v776, 0
      %v797 = vsel %vm378, %v777, 0
      %799 = vmatprep.subr.bf16.mxu0 %v788
      %800 = vmatpush1.bf16.msra.mxu0 %v787
      %801 = vmatprep.subr.bf16.mxu0 0
      %802 = vmatpush1.bf16.msra.mxu0 0
      %803 = vmatprep.subr.bf16.mxu0 0
      %804 = vmatpush1.bf16.msra.mxu0 0
      %805 = vmatprep.subr.bf16.mxu0 0
      %806 = vmatpush1.bf16.msra.mxu0 0
      %807 = vmatprep.subr.bf16.mxu0 0
      %808 = vmatpush1.bf16.msra.mxu0 0
      %809 = vmatprep.subr.bf16.mxu0 0
      %810 = vmatpush1.bf16.msra.mxu0 0
      %811 = vmatprep.subr.bf16.mxu0 0
      %812 = vmatpush1.bf16.msra.mxu0 0
      %813 = vmatprep.subr.bf16.mxu0 0
      %814 = vmatpush1.bf16.msra.mxu0 0
      %815 = vmatprep.subr.bf16.mxu0 0
      %816 = vmatpush1.bf16.msra.mxu0 0
      %817 = vmatprep.subr.bf16.mxu0 0
      %818 = vmatpush1.bf16.msra.mxu0 0
      %819 = vmatprep.subr.bf16.mxu0 0
      %820 = vmatpush1.bf16.msra.mxu0 0
      %821 = vmatprep.subr.bf16.mxu0 0
      %822 = vmatpush1.bf16.msra.mxu0 0
      %823 = vmatprep.subr.bf16.mxu0 0
      %824 = vmatpush1.bf16.msra.mxu0 0
      %825 = vmatprep.subr.bf16.mxu0 0
      %826 = vmatpush1.bf16.msra.mxu0 0
      %827 = vmatprep.subr.bf16.mxu0 0
      %828 = vmatpush1.bf16.msra.mxu0 0
      %829 = vmatprep.subr.bf16.mxu0 0
      %830 = vmatpush1.bf16.msra.mxu0 0
      %831 = vmatprep.mubr.bf16.mxu0 0
      %832 = vmatmul.mubr.bf16.gmra.mrb[0].mxu0 %v794
      %v833 = vpop.f32.mrb[0].mxu0
      %v834 = vadd.f32 0.0, %v833
      %v835 = vpop.f32.mrb[0].mxu0
      %v836 = vadd.f32 0.0, %v835
      %v837 = vpop.f32.mrb[0].mxu0
      %v838 = vadd.f32 0.0, %v837
      %v839 = vpop.f32.mrb[0].mxu0
      %v840 = vadd.f32 0.0, %v839
      %841 = vmatprep.mubr.bf16.mxu0 0
      %842 = vmatmul.mubr.bf16.gmra.mrb[0].mxu0 %v797
      %v843 = vpop.f32.mrb[0].mxu0
      %v844 = vadd.f32 0.0, %v843
      %v845 = vpop.f32.mrb[0].mxu0
      %v846 = vadd.f32 0.0, %v845
      %v847 = vpop.f32.mrb[0].mxu0
      %v848 = vadd.f32 0.0, %v847
      %v849 = vpop.f32.mrb[0].mxu0
      %v850 = vadd.f32 0.0, %v849
      %851 = vdwg.mxu0
      %852 = vmatprep.subr.bf16.mxu0 0
      %853 = vmatpush1.bf16.msra.mxu0 %v789
      %854 = vmatprep.subr.bf16.mxu0 0
      %855 = vmatpush1.bf16.msra.mxu0 0
      %856 = vmatprep.subr.bf16.mxu0 0
      %857 = vmatpush1.bf16.msra.mxu0 0
      %858 = vmatprep.subr.bf16.mxu0 0
      %859 = vmatpush1.bf16.msra.mxu0 0
      %860 = vmatprep.subr.bf16.mxu0 0
      %861 = vmatpush1.bf16.msra.mxu0 0
      %862 = vmatprep.subr.bf16.mxu0 0
      %863 = vmatpush1.bf16.msra.mxu0 0
      %864 = vmatprep.subr.bf16.mxu0 0
      %865 = vmatpush1.bf16.msra.mxu0 0
      %866 = vmatprep.subr.bf16.mxu0 0
      %867 = vmatpush1.bf16.msra.mxu0 0
      %868 = vmatprep.subr.bf16.mxu0 0
      %869 = vmatpush1.bf16.msra.mxu0 0
      %870 = vmatprep.subr.bf16.mxu0 0
      %871 = vmatpush1.bf16.msra.mxu0 0
      %872 = vmatprep.subr.bf16.mxu0 0
      %873 = vmatpush1.bf16.msra.mxu0 0
      %874 = vmatprep.subr.bf16.mxu0 0
      %875 = vmatpush1.bf16.msra.mxu0 0
      %876 = vmatprep.subr.bf16.mxu0 0
      %877 = vmatpush1.bf16.msra.mxu0 0
      %878 = vmatprep.subr.bf16.mxu0 0
      %879 = vmatpush1.bf16.msra.mxu0 0
      %880 = vmatprep.subr.bf16.mxu0 0
      %881 = vmatpush1.bf16.msra.mxu0 0
      %882 = vmatprep.subr.bf16.mxu0 0
      %883 = vmatpush1.bf16.msra.mxu0 0
      %884 = vmatprep.mubr.bf16.mxu0 0
      %885 = vmatmul.mubr.bf16.gmra.mrb[0].mxu0 %v794
      %v886 = vpop.f32.mrb[0].mxu0
      %v887 = vadd.f32 0.0, %v886
      %v888 = vpop.f32.mrb[0].mxu0
      %v889 = vpop.f32.mrb[0].mxu0
      %v890 = vadd.f32 0.0, %v889
      %v891 = vpop.f32.mrb[0].mxu0
      %892 = vmatprep.mubr.bf16.mxu0 0
      %893 = vmatmul.mubr.bf16.gmra.mrb[0].mxu0 %v797
      %v894 = vpop.f32.mrb[0].mxu0
      %v895 = vadd.f32 0.0, %v894
      %v896 = vpop.f32.mrb[0].mxu0
      %v897 = vpop.f32.mrb[0].mxu0
      %v898 = vadd.f32 0.0, %v897
      %v899 = vpop.f32.mrb[0].mxu0
      %900 = vdwg.mxu0
      %v901 = vadd.f32 %v751, %v834
      %v902 = vadd.f32 %v752, %v836
      %v903 = vadd.f32 %v753, %v887
      %v904 = vadd.f32 %v754, %v838
      %v905 = vadd.f32 %v755, %v840
      %v906 = vadd.f32 %v756, %v890
      %v907 = vadd.f32 %v757, %v844
      %v908 = vadd.f32 %v758, %v846
      %v909 = vadd.f32 %v759, %v895
      %v910 = vadd.f32 %v760, %v848
      %v911 = vadd.f32 %v761, %v850
      %v912 = vadd.f32 %v762, %v898
      %v913 = vld [vmem:[%s2] sm:$0xff]
      %v914 = vld [vmem:[%s2 + $0x8] sm:$0xff]
      %v915 = vld [vmem:[%s2 + $0x10] sm:$0xff]
      %v916 = vld [vmem:[%s2 + $0x18] sm:$0xff]
      %918 = vset.pattern.permute.xlu0 0
      %919 = vperm.xlu0 %918, %v913
      %v920 = vpop.permute.xlu0 %919
      %923 = vset.pattern.permute.xlu0 0
      %924 = vperm.xlu0 %923, %v914
      %v925 = vpop.permute.xlu0 %924
      %928 = vset.pattern.permute.xlu0 0
      %929 = vperm.xlu0 %928, %v915
      %v930 = vpop.permute.xlu0 %929
      %933 = vset.pattern.permute.xlu0 0
      %934 = vperm.xlu0 %933, %v916
      %v935 = vpop.permute.xlu0 %934
      %v937 = vadd.f32 %v901, %v920
      %v938 = vadd.f32 %v902, %v920
      %v939 = vadd.f32 %v903, %v920
      %v940 = vadd.f32 %v904, %v925
      %v941 = vadd.f32 %v905, %v925
      %v942 = vadd.f32 %v906, %v925
      %v943 = vadd.f32 %v907, %v930
      %v944 = vadd.f32 %v908, %v930
      %v945 = vadd.f32 %v909, %v930
      %v946 = vadd.f32 %v910, %v935
      %v947 = vadd.f32 %v911, %v935
      %v948 = vadd.f32 %v912, %v935
      %v949 = vxor.u32 %v937, 2147483648
      %v950 = vxor.u32 %v938, 2147483648
      %v951 = vxor.u32 %v939, 2147483648
      %v952 = vxor.u32 %v940, 2147483648
      %v953 = vxor.u32 %v941, 2147483648
      %v954 = vxor.u32 %v942, 2147483648
      %v955 = vxor.u32 %v943, 2147483648
      %v956 = vxor.u32 %v944, 2147483648
      %v957 = vxor.u32 %v945, 2147483648
      %v958 = vxor.u32 %v946, 2147483648
      %v959 = vxor.u32 %v947, 2147483648
      %v960 = vxor.u32 %v948, 2147483648
      %v961 = vmul.f32 %v949, 1.442695
      %v962 = vpow.pop %v961
      %v963 = vmul.f32 %v950, 1.442695
      %v964 = vpow.pop %v963
      %v965 = vmul.f32 %v951, 1.442695
      %v966 = vpow.pop %v965
      %v967 = vmul.f32 %v952, 1.442695
      %v968 = vpow.pop %v967
      %v969 = vmul.f32 %v953, 1.442695
      %v970 = vpow.pop %v969
      %v971 = vmul.f32 %v954, 1.442695
      %v972 = vpow.pop %v971
      %v973 = vmul.f32 %v955, 1.442695
      %v974 = vpow.pop %v973
      %v975 = vmul.f32 %v956, 1.442695
      %v976 = vpow.pop %v975
      %v977 = vmul.f32 %v957, 1.442695
      %v978 = vpow.pop %v977
      %v979 = vmul.f32 %v958, 1.442695
      %v980 = vpow.pop %v979
      %v981 = vmul.f32 %v959, 1.442695
      %v982 = vpow.pop %v981
      %v983 = vmul.f32 %v960, 1.442695
      %v984 = vpow.pop %v983
      %v985 = vadd.f32 %v962, 1.0
      %v986 = vadd.f32 %v964, 1.0
      %v987 = vadd.f32 %v966, 1.0
      %v988 = vadd.f32 %v968, 1.0
      %v989 = vadd.f32 %v970, 1.0
      %v990 = vadd.f32 %v972, 1.0
      %v991 = vadd.f32 %v974, 1.0
      %v992 = vadd.f32 %v976, 1.0
      %v993 = vadd.f32 %v978, 1.0
      %v994 = vadd.f32 %v980, 1.0
      %v995 = vadd.f32 %v982, 1.0
      %v996 = vadd.f32 %v984, 1.0
      %v997 = vrcp.pop %v985
      %v998 = vmul.f32 1.0, %v997
      %v999 = vrcp.pop %v986
      %v1000 = vmul.f32 1.0, %v999
      %v1001 = vrcp.pop %v987
      %v1002 = vmul.f32 1.0, %v1001
      %v1003 = vrcp.pop %v988
      %v1004 = vmul.f32 1.0, %v1003
      %v1005 = vrcp.pop %v989
      %v1006 = vmul.f32 1.0, %v1005
      %v1007 = vrcp.pop %v990
      %v1008 = vmul.f32 1.0, %v1007
      %v1009 = vrcp.pop %v991
      %v1010 = vmul.f32 1.0, %v1009
      %v1011 = vrcp.pop %v992
      %v1012 = vmul.f32 1.0, %v1011
      %v1013 = vrcp.pop %v993
      %v1014 = vmul.f32 1.0, %v1013
      %v1015 = vrcp.pop %v994
      %v1016 = vmul.f32 1.0, %v1015
      %v1017 = vrcp.pop %v995
      %v1018 = vmul.f32 1.0, %v1017
      %v1019 = vrcp.pop %v996
      %v1020 = vmul.f32 1.0, %v1019
      %v1021 = vmul.f32 %v937, %v998
      %v1022 = vmul.f32 %v938, %v1000
      %v1023 = vmul.f32 %v939, %v1002
      %v1024 = vmul.f32 %v940, %v1004
      %v1025 = vmul.f32 %v941, %v1006
      %v1026 = vmul.f32 %v942, %v1008
      %v1027 = vmul.f32 %v943, %v1010
      %v1028 = vmul.f32 %v944, %v1012
      %v1029 = vmul.f32 %v945, %v1014
      %v1030 = vmul.f32 %v946, %v1016
      %v1031 = vmul.f32 %v947, %v1018
      %v1032 = vmul.f32 %v948, %v1020
      %v1033 = vld [vmem:[%s3] sm:$0xf]
      %v1034 = vld [vmem:[%s3 + $0x4] sm:$0xf]
      %v1035 = vld [vmem:[%s3 + $0x8] sm:$0xf]
      %v1036 = vld [vmem:[%s3 + $0xc] sm:$0xf]
      %v1037 = vld [vmem:[%s3 + $0x10] sm:$0xf]
      %v1038 = vld [vmem:[%s3 + $0x14] sm:$0xf]
      %v1039 = vld [vmem:[%s3 + $0x18] sm:$0xf]
      %v1040 = vld [vmem:[%s3 + $0x1c] sm:$0xf]
      %v1041 = vld [vmem:[%s3 + $0x20] sm:$0xf]
      %v1042 = vld [vmem:[%s3 + $0x24] sm:$0xf]
      %v1043 = vld [vmem:[%s3 + $0x28] sm:$0xf]
      %v1044 = vld [vmem:[%s3 + $0x2c] sm:$0xf]
      %v1045 = vld [vmem:[%s3 + $0x30] sm:$0xf]
      %v1046 = vld [vmem:[%s3 + $0x34] sm:$0xf]
      %v1047 = vld [vmem:[%s3 + $0x38] sm:$0xf]
      %v1048 = vld [vmem:[%s3 + $0x3c] sm:$0xf]
      %v1049 = vpack.c.bf16 %v1024, %v1021
      %v1050 = vpack.c.bf16 %v1025, %v1022
      %v1051 = vpack.c.bf16 %v1026, %v1023
      %v1052 = vpack.c.bf16 %v1030, %v1027
      %v1053 = vpack.c.bf16 %v1031, %v1028
      %v1054 = vpack.c.bf16 %v1032, %v1029
      %v1055 = vld [vmem:[%s4] sm:$0xff]
      %v1056 = vld [vmem:[%s4 + $0x8] sm:$0xff]
      %v1057 = vld [vmem:[%s4 + $0x10] sm:$0xff]
      %v1058 = vld [vmem:[%s4 + $0x18] sm:$0xff]
      %v1059 = vld [vmem:[%s4 + $0x20] sm:$0xff]
      %v1060 = vld [vmem:[%s4 + $0x28] sm:$0xff]
      %v1061 = vld [vmem:[%s4 + $0x30] sm:$0xff]
      %v1062 = vld [vmem:[%s4 + $0x38] sm:$0xff]
      %v1063 = vld [vmem:[%s4 + $0x40] sm:$0xff]
      %v1064 = vld [vmem:[%s4 + $0x48] sm:$0xff]
      %v1065 = vld [vmem:[%s4 + $0x50] sm:$0xff]
      %v1066 = vld [vmem:[%s4 + $0x58] sm:$0xff]
      %v1067 = vld [vmem:[%s4 + $0x60] sm:$0xff]
      %v1068 = vld [vmem:[%s4 + $0x68] sm:$0xff]
      %v1069 = vld [vmem:[%s4 + $0x70] sm:$0xff]
      %v1070 = vld [vmem:[%s4 + $0x78] sm:$0xff]
      %1072 = vset.pattern.permute.xlu0 0
      %1073 = vperm.xlu0 %1072, %v1055
      %v1074 = vpop.permute.xlu0 %1073
      %1077 = vset.pattern.permute.xlu0 0
      %1078 = vperm.xlu0 %1077, %v1056
      %v1079 = vpop.permute.xlu0 %1078
      %1082 = vset.pattern.permute.xlu0 0
      %1083 = vperm.xlu0 %1082, %v1057
      %v1084 = vpop.permute.xlu0 %1083
      %1087 = vset.pattern.permute.xlu0 0
      %1088 = vperm.xlu0 %1087, %v1058
      %v1089 = vpop.permute.xlu0 %1088
      %1092 = vset.pattern.permute.xlu0 0
      %1093 = vperm.xlu0 %1092, %v1059
      %v1094 = vpop.permute.xlu0 %1093
      %1097 = vset.pattern.permute.xlu0 0
      %1098 = vperm.xlu0 %1097, %v1060
      %v1099 = vpop.permute.xlu0 %1098
      %1102 = vset.pattern.permute.xlu0 0
      %1103 = vperm.xlu0 %1102, %v1061
      %v1104 = vpop.permute.xlu0 %1103
      %1107 = vset.pattern.permute.xlu0 0
      %1108 = vperm.xlu0 %1107, %v1062
      %v1109 = vpop.permute.xlu0 %1108
      %1112 = vset.pattern.permute.xlu0 0
      %1113 = vperm.xlu0 %1112, %v1063
      %v1114 = vpop.permute.xlu0 %1113
      %1117 = vset.pattern.permute.xlu0 0
      %1118 = vperm.xlu0 %1117, %v1064
      %v1119 = vpop.permute.xlu0 %1118
      %1122 = vset.pattern.permute.xlu0 0
      %1123 = vperm.xlu0 %1122, %v1065
      %v1124 = vpop.permute.xlu0 %1123
      %1127 = vset.pattern.permute.xlu0 0
      %1128 = vperm.xlu0 %1127, %v1066
      %v1129 = vpop.permute.xlu0 %1128
      %1132 = vset.pattern.permute.xlu0 0
      %1133 = vperm.xlu0 %1132, %v1067
      %v1134 = vpop.permute.xlu0 %1133
      %1137 = vset.pattern.permute.xlu0 0
      %1138 = vperm.xlu0 %1137, %v1068
      %v1139 = vpop.permute.xlu0 %1138
      %1142 = vset.pattern.permute.xlu0 0
      %1143 = vperm.xlu0 %1142, %v1069
      %v1144 = vpop.permute.xlu0 %1143
      %1147 = vset.pattern.permute.xlu0 0
      %1148 = vperm.xlu0 %1147, %v1070
      %v1149 = vpop.permute.xlu0 %1148
      %v1167 = vunpack.c.l.b16 %v1033
      %v1168 = vunpack.c.l.b16 %v1034
      %v1169 = vunpack.c.l.b16 %v1035
      %v1170 = vunpack.c.l.b16 %v1036
      %v1171 = vunpack.c.l.b16 %v1037
      %v1172 = vunpack.c.l.b16 %v1038
      %v1173 = vunpack.c.l.b16 %v1039
      %v1174 = vunpack.c.l.b16 %v1040
      %v1175 = vunpack.c.l.b16 %v1041
      %v1176 = vunpack.c.l.b16 %v1042
      %v1177 = vunpack.c.l.b16 %v1043
      %v1178 = vunpack.c.l.b16 %v1044
      %v1179 = vunpack.c.l.b16 %v1045
      %v1180 = vunpack.c.l.b16 %v1046
      %v1181 = vunpack.c.l.b16 %v1047
      %v1182 = vunpack.c.l.b16 %v1048
      %v1183 = vpack.c.b16 %v1168, %v1167
      %v1184 = vpack.c.b16 %v1170, %v1169
      %v1185 = vpack.c.b16 %v1172, %v1171
      %v1186 = vpack.c.b16 %v1174, %v1173
      %v1187 = vpack.c.b16 %v1176, %v1175
      %v1188 = vpack.c.b16 %v1178, %v1177
      %v1189 = vpack.c.b16 %v1180, %v1179
      %v1190 = vpack.c.b16 %v1182, %v1181
      %vm1191 = vcmask 261120
      %v1193 = vsel %vm1191, %v1183, 0
      %v1196 = vsel %vm1191, %v1184, 0
      %v1199 = vsel %vm1191, %v1185, 0
      %v1202 = vsel %vm1191, %v1186, 0
      %v1205 = vsel %vm1191, %v1187, 0
      %v1208 = vsel %vm1191, %v1188, 0
      %v1211 = vsel %vm1191, %v1189, 0
      %v1214 = vsel %vm1191, %v1190, 0
      %1216 = vmatprep.subr.bf16.mxu0 %v1050
      %1217 = vmatpush1.bf16.msra.mxu0 %v1049
      %1218 = vmatprep.subr.bf16.mxu0 %v1053
      %1219 = vmatpush1.bf16.msra.mxu0 %v1052
      %1220 = vmatprep.subr.bf16.mxu0 0
      %1221 = vmatpush1.bf16.msra.mxu0 0
      %1222 = vmatprep.subr.bf16.mxu0 0
      %1223 = vmatpush1.bf16.msra.mxu0 0
      %1224 = vmatprep.subr.bf16.mxu0 0
      %1225 = vmatpush1.bf16.msra.mxu0 0
      %1226 = vmatprep.subr.bf16.mxu0 0
      %1227 = vmatpush1.bf16.msra.mxu0 0
      %1228 = vmatprep.subr.bf16.mxu0 0
      %1229 = vmatpush1.bf16.msra.mxu0 0
      %1230 = vmatprep.subr.bf16.mxu0 0
      %1231 = vmatpush1.bf16.msra.mxu0 0
      %1232 = vmatprep.subr.bf16.mxu0 0
      %1233 = vmatpush1.bf16.msra.mxu0 0
      %1234 = vmatprep.subr.bf16.mxu0 0
      %1235 = vmatpush1.bf16.msra.mxu0 0
      %1236 = vmatprep.subr.bf16.mxu0 0
      %1237 = vmatpush1.bf16.msra.mxu0 0
      %1238 = vmatprep.subr.bf16.mxu0 0
      %1239 = vmatpush1.bf16.msra.mxu0 0
      %1240 = vmatprep.subr.bf16.mxu0 0
      %1241 = vmatpush1.bf16.msra.mxu0 0
      %1242 = vmatprep.subr.bf16.mxu0 0
      %1243 = vmatpush1.bf16.msra.mxu0 0
      %1244 = vmatprep.subr.bf16.mxu0 0
      %1245 = vmatpush1.bf16.msra.mxu0 0
      %1246 = vmatprep.subr.bf16.mxu0 0
      %1247 = vmatpush1.bf16.msra.mxu0 0
      %1248 = vmatprep.mubr.bf16.mxu0 0
      %1249 = vmatmul.mubr.bf16.gmra.mrb[0].mxu0 %v1193
      %v1250 = vpop.f32.mrb[0].mxu0
      %v1251 = vadd.f32 %v1074, %v1250
      %v1252 = vpop.f32.mrb[0].mxu0
      %v1253 = vadd.f32 %v1074, %v1252
      %v1254 = vpop.f32.mrb[0].mxu0
      %v1255 = vadd.f32 %v1079, %v1254
      %v1256 = vpop.f32.mrb[0].mxu0
      %v1257 = vadd.f32 %v1079, %v1256
      %1258 = vmatprep.mubr.bf16.mxu0 0
      %1259 = vmatmul.mubr.bf16.gmra.mrb[0].mxu0 %v1196
      %v1260 = vpop.f32.mrb[0].mxu0
      %v1261 = vadd.f32 %v1084, %v1260
      %v1262 = vpop.f32.mrb[0].mxu0
      %v1263 = vadd.f32 %v1084, %v1262
      %v1264 = vpop.f32.mrb[0].mxu0
      %v1265 = vadd.f32 %v1089, %v1264
      %v1266 = vpop.f32.mrb[0].mxu0
      %v1267 = vadd.f32 %v1089, %v1266
      %1268 = vmatprep.mubr.bf16.mxu0 0
      %1269 = vmatmul.mubr.bf16.gmra.mrb[0].mxu0 %v1199
      %v1270 = vpop.f32.mrb[0].mxu0
      %v1271 = vadd.f32 %v1094, %v1270
      %v1272 = vpop.f32.mrb[0].mxu0
      %v1273 = vadd.f32 %v1094, %v1272
      %v1274 = vpop.f32.mrb[0].mxu0
      %v1275 = vadd.f32 %v1099, %v1274
      %v1276 = vpop.f32.mrb[0].mxu0
      %v1277 = vadd.f32 %v1099, %v1276
      %1278 = vmatprep.mubr.bf16.mxu0 0
      %1279 = vmatmul.mubr.bf16.gmra.mrb[0].mxu0 %v1202
      %v1280 = vpop.f32.mrb[0].mxu0
      %v1281 = vadd.f32 %v1104, %v1280
      %v1282 = vpop.f32.mrb[0].mxu0
      %v1283 = vadd.f32 %v1104, %v1282
      %v1284 = vpop.f32.mrb[0].mxu0
      %v1285 = vadd.f32 %v1109, %v1284
      %v1286 = vpop.f32.mrb[0].mxu0
      %v1287 = vadd.f32 %v1109, %v1286
      %1288 = vmatprep.mubr.bf16.mxu0 0
      %1289 = vmatmul.mubr.bf16.gmra.mrb[0].mxu0 %v1205
      %v1290 = vpop.f32.mrb[0].mxu0
      %v1291 = vadd.f32 %v1114, %v1290
      %v1292 = vpop.f32.mrb[0].mxu0
      %v1293 = vadd.f32 %v1114, %v1292
      %v1294 = vpop.f32.mrb[0].mxu0
      %v1295 = vadd.f32 %v1119, %v1294
      %v1296 = vpop.f32.mrb[0].mxu0
      %v1297 = vadd.f32 %v1119, %v1296
      %1298 = vmatprep.mubr.bf16.mxu0 0
      %1299 = vmatmul.mubr.bf16.gmra.mrb[0].mxu0 %v1208
      %v1300 = vpop.f32.mrb[0].mxu0
      %v1301 = vadd.f32 %v1124, %v1300
      %v1302 = vpop.f32.mrb[0].mxu0
      %v1303 = vadd.f32 %v1124, %v1302
      %v1304 = vpop.f32.mrb[0].mxu0
      %v1305 = vadd.f32 %v1129, %v1304
      %v1306 = vpop.f32.mrb[0].mxu0
      %v1307 = vadd.f32 %v1129, %v1306
      %1308 = vmatprep.mubr.bf16.mxu0 0
      %1309 = vmatmul.mubr.bf16.gmra.mrb[0].mxu0 %v1211
      %v1310 = vpop.f32.mrb[0].mxu0
      %v1311 = vadd.f32 %v1134, %v1310
      %v1312 = vpop.f32.mrb[0].mxu0
      %v1313 = vadd.f32 %v1134, %v1312
      %v1314 = vpop.f32.mrb[0].mxu0
      %v1315 = vadd.f32 %v1139, %v1314
      %v1316 = vpop.f32.mrb[0].mxu0
      %v1317 = vadd.f32 %v1139, %v1316
      %1318 = vmatprep.mubr.bf16.mxu0 0
      %1319 = vmatmul.mubr.bf16.gmra.mrb[0].mxu0 %v1214
      %v1320 = vpop.f32.mrb[0].mxu0
      %v1321 = vadd.f32 %v1144, %v1320
      %v1322 = vpop.f32.mrb[0].mxu0
      %v1323 = vadd.f32 %v1144, %v1322
      %v1324 = vpop.f32.mrb[0].mxu0
      %v1325 = vadd.f32 %v1149, %v1324
      %v1326 = vpop.f32.mrb[0].mxu0
      %v1327 = vadd.f32 %v1149, %v1326
      %1328 = vdwg.mxu0
      %1329 = vmatprep.subr.bf16.mxu0 0
      %1330 = vmatpush1.bf16.msra.mxu0 %v1051
      %1331 = vmatprep.subr.bf16.mxu0 0
      %1332 = vmatpush1.bf16.msra.mxu0 %v1054
      %1333 = vmatprep.subr.bf16.mxu0 0
      %1334 = vmatpush1.bf16.msra.mxu0 0
      %1335 = vmatprep.subr.bf16.mxu0 0
      %1336 = vmatpush1.bf16.msra.mxu0 0
      %1337 = vmatprep.subr.bf16.mxu0 0
      %1338 = vmatpush1.bf16.msra.mxu0 0
      %1339 = vmatprep.subr.bf16.mxu0 0
      %1340 = vmatpush1.bf16.msra.mxu0 0
      %1341 = vmatprep.subr.bf16.mxu0 0
      %1342 = vmatpush1.bf16.msra.mxu0 0
      %1343 = vmatprep.subr.bf16.mxu0 0
      %1344 = vmatpush1.bf16.msra.mxu0 0
      %1345 = vmatprep.subr.bf16.mxu0 0
      %1346 = vmatpush1.bf16.msra.mxu0 0
      %1347 = vmatprep.subr.bf16.mxu0 0
      %1348 = vmatpush1.bf16.msra.mxu0 0
      %1349 = vmatprep.subr.bf16.mxu0 0
      %1350 = vmatpush1.bf16.msra.mxu0 0
      %1351 = vmatprep.subr.bf16.mxu0 0
      %1352 = vmatpush1.bf16.msra.mxu0 0
      %1353 = vmatprep.subr.bf16.mxu0 0
      %1354 = vmatpush1.bf16.msra.mxu0 0
      %1355 = vmatprep.subr.bf16.mxu0 0
      %1356 = vmatpush1.bf16.msra.mxu0 0
      %1357 = vmatprep.subr.bf16.mxu0 0
      %1358 = vmatpush1.bf16.msra.mxu0 0
      %1359 = vmatprep.subr.bf16.mxu0 0
      %1360 = vmatpush1.bf16.msra.mxu0 0
      %1361 = vmatprep.mubr.bf16.mxu0 0
      %1362 = vmatmul.mubr.bf16.gmra.mrb[0].mxu0 %v1193
      %v1363 = vpop.f32.mrb[0].mxu0
      %v1364 = vadd.f32 %v1074, %v1363
      %v1365 = vpop.f32.mrb[0].mxu0
      %v1366 = vpop.f32.mrb[0].mxu0
      %v1367 = vadd.f32 %v1079, %v1366
      %v1368 = vpop.f32.mrb[0].mxu0
      %1369 = vmatprep.mubr.bf16.mxu0 0
      %1370 = vmatmul.mubr.bf16.gmra.mrb[0].mxu0 %v1196
      %v1371 = vpop.f32.mrb[0].mxu0
      %v1372 = vadd.f32 %v1084, %v1371
      %v1373 = vpop.f32.mrb[0].mxu0
      %v1374 = vpop.f32.mrb[0].mxu0
      %v1375 = vadd.f32 %v1089, %v1374
      %v1376 = vpop.f32.mrb[0].mxu0
      %1377 = vmatprep.mubr.bf16.mxu0 0
      %1378 = vmatmul.mubr.bf16.gmra.mrb[0].mxu0 %v1199
      %v1379 = vpop.f32.mrb[0].mxu0
      %v1380 = vadd.f32 %v1094, %v1379
      %v1381 = vpop.f32.mrb[0].mxu0
      %v1382 = vpop.f32.mrb[0].mxu0
      %v1383 = vadd.f32 %v1099, %v1382
      %v1384 = vpop.f32.mrb[0].mxu0
      %1385 = vmatprep.mubr.bf16.mxu0 0
      %1386 = vmatmul.mubr.bf16.gmra.mrb[0].mxu0 %v1202
      %v1387 = vpop.f32.mrb[0].mxu0
      %v1388 = vadd.f32 %v1104, %v1387
      %v1389 = vpop.f32.mrb[0].mxu0
      %v1390 = vpop.f32.mrb[0].mxu0
      %v1391 = vadd.f32 %v1109, %v1390
      %v1392 = vpop.f32.mrb[0].mxu0
      %1393 = vmatprep.mubr.bf16.mxu0 0
      %1394 = vmatmul.mubr.bf16.gmra.mrb[0].mxu0 %v1205
      %v1395 = vpop.f32.mrb[0].mxu0
      %v1396 = vadd.f32 %v1114, %v1395
      %v1397 = vpop.f32.mrb[0].mxu0
      %v1398 = vpop.f32.mrb[0].mxu0
      %v1399 = vadd.f32 %v1119, %v1398
      %v1400 = vpop.f32.mrb[0].mxu0
      %1401 = vmatprep.mubr.bf16.mxu0 0
      %1402 = vmatmul.mubr.bf16.gmra.mrb[0].mxu0 %v1208
      %v1403 = vpop.f32.mrb[0].mxu0
      %v1404 = vadd.f32 %v1124, %v1403
      %v1405 = vpop.f32.mrb[0].mxu0
      %v1406 = vpop.f32.mrb[0].mxu0
      %v1407 = vadd.f32 %v1129, %v1406
      %v1408 = vpop.f32.mrb[0].mxu0
      %1409 = vmatprep.mubr.bf16.mxu0 0
      %1410 = vmatmul.mubr.bf16.gmra.mrb[0].mxu0 %v1211
      %v1411 = vpop.f32.mrb[0].mxu0
      %v1412 = vadd.f32 %v1134, %v1411
      %v1413 = vpop.f32.mrb[0].mxu0
      %v1414 = vpop.f32.mrb[0].mxu0
      %v1415 = vadd.f32 %v1139, %v1414
      %v1416 = vpop.f32.mrb[0].mxu0
      %1417 = vmatprep.mubr.bf16.mxu0 0
      %1418 = vmatmul.mubr.bf16.gmra.mrb[0].mxu0 %v1214
      %v1419 = vpop.f32.mrb[0].mxu0
      %v1420 = vadd.f32 %v1144, %v1419
      %v1421 = vpop.f32.mrb[0].mxu0
      %v1422 = vpop.f32.mrb[0].mxu0
      %v1423 = vadd.f32 %v1149, %v1422
      %v1424 = vpop.f32.mrb[0].mxu0
      %1425 = vdwg.mxu0
      %v1426 = vxor.u32 %v1251, 2147483648
      %v1427 = vxor.u32 %v1253, 2147483648
      %v1428 = vxor.u32 %v1364, 2147483648
      %v1429 = vxor.u32 %v1255, 2147483648
      %v1430 = vxor.u32 %v1257, 2147483648
      %v1431 = vxor.u32 %v1367, 2147483648
      %v1432 = vxor.u32 %v1261, 2147483648
      %v1433 = vxor.u32 %v1263, 2147483648
      %v1434 = vxor.u32 %v1372, 2147483648
      %v1435 = vxor.u32 %v1265, 2147483648
      %v1436 = vxor.u32 %v1267, 2147483648
      %v1437 = vxor.u32 %v1375, 2147483648
      %v1438 = vxor.u32 %v1271, 2147483648
      %v1439 = vxor.u32 %v1273, 2147483648
      %v1440 = vxor.u32 %v1380, 2147483648
      %v1441 = vxor.u32 %v1275, 2147483648
      %v1442 = vxor.u32 %v1277, 2147483648
      %v1443 = vxor.u32 %v1383, 2147483648
      %v1444 = vxor.u32 %v1281, 2147483648
      %v1445 = vxor.u32 %v1283, 2147483648
      %v1446 = vxor.u32 %v1388, 2147483648
      %v1447 = vxor.u32 %v1285, 2147483648
      %v1448 = vxor.u32 %v1287, 2147483648
      %v1449 = vxor.u32 %v1391, 2147483648
      %v1450 = vxor.u32 %v1291, 2147483648
      %v1451 = vxor.u32 %v1293, 2147483648
      %v1452 = vxor.u32 %v1396, 2147483648
      %v1453 = vxor.u32 %v1295, 2147483648
      %v1454 = vxor.u32 %v1297, 2147483648
      %v1455 = vxor.u32 %v1399, 2147483648
      %v1456 = vxor.u32 %v1301, 2147483648
      %v1457 = vxor.u32 %v1303, 2147483648
      %v1458 = vxor.u32 %v1404, 2147483648
      %v1459 = vxor.u32 %v1305, 2147483648
      %v1460 = vxor.u32 %v1307, 2147483648
      %v1461 = vxor.u32 %v1407, 2147483648
      %v1462 = vxor.u32 %v1311, 2147483648
      %v1463 = vxor.u32 %v1313, 2147483648
      %v1464 = vxor.u32 %v1412, 2147483648
      %v1465 = vxor.u32 %v1315, 2147483648
      %v1466 = vxor.u32 %v1317, 2147483648
      %v1467 = vxor.u32 %v1415, 2147483648
      %v1468 = vxor.u32 %v1321, 2147483648
      %v1469 = vxor.u32 %v1323, 2147483648
      %v1470 = vxor.u32 %v1420, 2147483648
      %v1471 = vxor.u32 %v1325, 2147483648
      %v1472 = vxor.u32 %v1327, 2147483648
      %v1473 = vxor.u32 %v1423, 2147483648
      %v1474 = vmul.f32 %v1426, 1.442695
      %v1475 = vpow.pop %v1474
      %v1476 = vmul.f32 %v1427, 1.442695
      %v1477 = vpow.pop %v1476
      %v1478 = vmul.f32 %v1428, 1.442695
      %v1479 = vpow.pop %v1478
      %v1480 = vmul.f32 %v1429, 1.442695
      %v1481 = vpow.pop %v1480
      %v1482 = vmul.f32 %v1430, 1.442695
      %v1483 = vpow.pop %v1482
      %v1484 = vmul.f32 %v1431, 1.442695
      %v1485 = vpow.pop %v1484
      %v1486 = vmul.f32 %v1432, 1.442695
      %v1487 = vpow.pop %v1486
      %v1488 = vmul.f32 %v1433, 1.442695
      %v1489 = vpow.pop %v1488
      %v1490 = vmul.f32 %v1434, 1.442695
      %v1491 = vpow.pop %v1490
      %v1492 = vmul.f32 %v1435, 1.442695
      %v1493 = vpow.pop %v1492
      %v1494 = vmul.f32 %v1436, 1.442695
      %v1495 = vpow.pop %v1494
      %v1496 = vmul.f32 %v1437, 1.442695
      %v1497 = vpow.pop %v1496
      %v1498 = vmul.f32 %v1438, 1.442695
      %v1499 = vpow.pop %v1498
      %v1500 = vmul.f32 %v1439, 1.442695
      %v1501 = vpow.pop %v1500
      %v1502 = vmul.f32 %v1440, 1.442695
      %v1503 = vpow.pop %v1502
      %v1504 = vmul.f32 %v1441, 1.442695
      %v1505 = vpow.pop %v1504
      %v1506 = vmul.f32 %v1442, 1.442695
      %v1507 = vpow.pop %v1506
      %v1508 = vmul.f32 %v1443, 1.442695
      %v1509 = vpow.pop %v1508
      %v1510 = vmul.f32 %v1444, 1.442695
      %v1511 = vpow.pop %v1510
      %v1512 = vmul.f32 %v1445, 1.442695
      %v1513 = vpow.pop %v1512
      %v1514 = vmul.f32 %v1446, 1.442695
      %v1515 = vpow.pop %v1514
      %v1516 = vmul.f32 %v1447, 1.442695
      %v1517 = vpow.pop %v1516
      %v1518 = vmul.f32 %v1448, 1.442695
      %v1519 = vpow.pop %v1518
      %v1520 = vmul.f32 %v1449, 1.442695
      %v1521 = vpow.pop %v1520
      %v1522 = vmul.f32 %v1450, 1.442695
      %v1523 = vpow.pop %v1522
      %v1524 = vmul.f32 %v1451, 1.442695
      %v1525 = vpow.pop %v1524
      %v1526 = vmul.f32 %v1452, 1.442695
      %v1527 = vpow.pop %v1526
      %v1528 = vmul.f32 %v1453, 1.442695
      %v1529 = vpow.pop %v1528
      %v1530 = vmul.f32 %v1454, 1.442695
      %v1531 = vpow.pop %v1530
      %v1532 = vmul.f32 %v1455, 1.442695
      %v1533 = vpow.pop %v1532
      %v1534 = vmul.f32 %v1456, 1.442695
      %v1535 = vpow.pop %v1534
      %v1536 = vmul.f32 %v1457, 1.442695
      %v1537 = vpow.pop %v1536
      %v1538 = vmul.f32 %v1458, 1.442695
      %v1539 = vpow.pop %v1538
      %v1540 = vmul.f32 %v1459, 1.442695
      %v1541 = vpow.pop %v1540
      %v1542 = vmul.f32 %v1460, 1.442695
      %v1543 = vpow.pop %v1542
      %v1544 = vmul.f32 %v1461, 1.442695
      %v1545 = vpow.pop %v1544
      %v1546 = vmul.f32 %v1462, 1.442695
      %v1547 = vpow.pop %v1546
      %v1548 = vmul.f32 %v1463, 1.442695
      %v1549 = vpow.pop %v1548
      %v1550 = vmul.f32 %v1464, 1.442695
      %v1551 = vpow.pop %v1550
      %v1552 = vmul.f32 %v1465, 1.442695
      %v1553 = vpow.pop %v1552
      %v1554 = vmul.f32 %v1466, 1.442695
      %v1555 = vpow.pop %v1554
      %v1556 = vmul.f32 %v1467, 1.442695
      %v1557 = vpow.pop %v1556
      %v1558 = vmul.f32 %v1468, 1.442695
      %v1559 = vpow.pop %v1558
      %v1560 = vmul.f32 %v1469, 1.442695
      %v1561 = vpow.pop %v1560
      %v1562 = vmul.f32 %v1470, 1.442695
      %v1563 = vpow.pop %v1562
      %v1564 = vmul.f32 %v1471, 1.442695
      %v1565 = vpow.pop %v1564
      %v1566 = vmul.f32 %v1472, 1.442695
      %v1567 = vpow.pop %v1566
      %v1568 = vmul.f32 %v1473, 1.442695
      %v1569 = vpow.pop %v1568
      %v1570 = vadd.f32 %v1475, 1.0
      %v1571 = vadd.f32 %v1477, 1.0
      %v1572 = vadd.f32 %v1479, 1.0
      %v1573 = vadd.f32 %v1481, 1.0
      %v1574 = vadd.f32 %v1483, 1.0
      %v1575 = vadd.f32 %v1485, 1.0
      %v1576 = vadd.f32 %v1487, 1.0
      %v1577 = vadd.f32 %v1489, 1.0
      %v1578 = vadd.f32 %v1491, 1.0
      %v1579 = vadd.f32 %v1493, 1.0
      %v1580 = vadd.f32 %v1495, 1.0
      %v1581 = vadd.f32 %v1497, 1.0
      %v1582 = vadd.f32 %v1499, 1.0
      %v1583 = vadd.f32 %v1501, 1.0
      %v1584 = vadd.f32 %v1503, 1.0
      %v1585 = vadd.f32 %v1505, 1.0
      %v1586 = vadd.f32 %v1507, 1.0
      %v1587 = vadd.f32 %v1509, 1.0
      %v1588 = vadd.f32 %v1511, 1.0
      %v1589 = vadd.f32 %v1513, 1.0
      %v1590 = vadd.f32 %v1515, 1.0
      %v1591 = vadd.f32 %v1517, 1.0
      %v1592 = vadd.f32 %v1519, 1.0
      %v1593 = vadd.f32 %v1521, 1.0
      %v1594 = vadd.f32 %v1523, 1.0
      %v1595 = vadd.f32 %v1525, 1.0
      %v1596 = vadd.f32 %v1527, 1.0
      %v1597 = vadd.f32 %v1529, 1.0
      %v1598 = vadd.f32 %v1531, 1.0
      %v1599 = vadd.f32 %v1533, 1.0
      %v1600 = vadd.f32 %v1535, 1.0
      %v1601 = vadd.f32 %v1537, 1.0
      %v1602 = vadd.f32 %v1539, 1.0
      %v1603 = vadd.f32 %v1541, 1.0
      %v1604 = vadd.f32 %v1543, 1.0
      %v1605 = vadd.f32 %v1545, 1.0
      %v1606 = vadd.f32 %v1547, 1.0
      %v1607 = vadd.f32 %v1549, 1.0
      %v1608 = vadd.f32 %v1551, 1.0
      %v1609 = vadd.f32 %v1553, 1.0
      %v1610 = vadd.f32 %v1555, 1.0
      %v1611 = vadd.f32 %v1557, 1.0
      %v1612 = vadd.f32 %v1559, 1.0
      %v1613 = vadd.f32 %v1561, 1.0
      %v1614 = vadd.f32 %v1563, 1.0
      %v1615 = vadd.f32 %v1565, 1.0
      %v1616 = vadd.f32 %v1567, 1.0
      %v1617 = vadd.f32 %v1569, 1.0
      %v1618 = vrcp.pop %v1570
      %v1619 = vmul.f32 1.0, %v1618
      %v1620 = vrcp.pop %v1571
      %v1621 = vmul.f32 1.0, %v1620
      %v1622 = vrcp.pop %v1572
      %v1623 = vmul.f32 1.0, %v1622
      %v1624 = vrcp.pop %v1573
      %v1625 = vmul.f32 1.0, %v1624
      %v1626 = vrcp.pop %v1574
      %v1627 = vmul.f32 1.0, %v1626
      %v1628 = vrcp.pop %v1575
      %v1629 = vmul.f32 1.0, %v1628
      %v1630 = vrcp.pop %v1576
      %v1631 = vmul.f32 1.0, %v1630
      %v1632 = vrcp.pop %v1577
      %v1633 = vmul.f32 1.0, %v1632
      %v1634 = vrcp.pop %v1578
      %v1635 = vmul.f32 1.0, %v1634
      %v1636 = vrcp.pop %v1579
      %v1637 = vmul.f32 1.0, %v1636
      %v1638 = vrcp.pop %v1580
      %v1639 = vmul.f32 1.0, %v1638
      %v1640 = vrcp.pop %v1581
      %v1641 = vmul.f32 1.0, %v1640
      %v1642 = vrcp.pop %v1582
      %v1643 = vmul.f32 1.0, %v1642
      %v1644 = vrcp.pop %v1583
      %v1645 = vmul.f32 1.0, %v1644
      %v1646 = vrcp.pop %v1584
      %v1647 = vmul.f32 1.0, %v1646
      %v1648 = vrcp.pop %v1585
      %v1649 = vmul.f32 1.0, %v1648
      %v1650 = vrcp.pop %v1586
      %v1651 = vmul.f32 1.0, %v1650
      %v1652 = vrcp.pop %v1587
      %v1653 = vmul.f32 1.0, %v1652
      %v1654 = vrcp.pop %v1588
      %v1655 = vmul.f32 1.0, %v1654
      %v1656 = vrcp.pop %v1589
      %v1657 = vmul.f32 1.0, %v1656
      %v1658 = vrcp.pop %v1590
      %v1659 = vmul.f32 1.0, %v1658
      %v1660 = vrcp.pop %v1591
      %v1661 = vmul.f32 1.0, %v1660
      %v1662 = vrcp.pop %v1592
      %v1663 = vmul.f32 1.0, %v1662
      %v1664 = vrcp.pop %v1593
      %v1665 = vmul.f32 1.0, %v1664
      %v1666 = vrcp.pop %v1594
      %v1667 = vmul.f32 1.0, %v1666
      %v1668 = vrcp.pop %v1595
      %v1669 = vmul.f32 1.0, %v1668
      %v1670 = vrcp.pop %v1596
      %v1671 = vmul.f32 1.0, %v1670
      %v1672 = vrcp.pop %v1597
      %v1673 = vmul.f32 1.0, %v1672
      %v1674 = vrcp.pop %v1598
      %v1675 = vmul.f32 1.0, %v1674
      %v1676 = vrcp.pop %v1599
      %v1677 = vmul.f32 1.0, %v1676
      %v1678 = vrcp.pop %v1600
      %v1679 = vmul.f32 1.0, %v1678
      %v1680 = vrcp.pop %v1601
      %v1681 = vmul.f32 1.0, %v1680
      %v1682 = vrcp.pop %v1602
      %v1683 = vmul.f32 1.0, %v1682
      %v1684 = vrcp.pop %v1603
      %v1685 = vmul.f32 1.0, %v1684
      %v1686 = vrcp.pop %v1604
      %v1687 = vmul.f32 1.0, %v1686
      %v1688 = vrcp.pop %v1605
      %v1689 = vmul.f32 1.0, %v1688
      %v1690 = vrcp.pop %v1606
      %v1691 = vmul.f32 1.0, %v1690
      %v1692 = vrcp.pop %v1607
      %v1693 = vmul.f32 1.0, %v1692
      %v1694 = vrcp.pop %v1608
      %v1695 = vmul.f32 1.0, %v1694
      %v1696 = vrcp.pop %v1609
      %v1697 = vmul.f32 1.0, %v1696
      %v1698 = vrcp.pop %v1610
      %v1699 = vmul.f32 1.0, %v1698
      %v1700 = vrcp.pop %v1611
      %v1701 = vmul.f32 1.0, %v1700
      %v1702 = vrcp.pop %v1612
      %v1703 = vmul.f32 1.0, %v1702
      %v1704 = vrcp.pop %v1613
      %v1705 = vmul.f32 1.0, %v1704
      %v1706 = vrcp.pop %v1614
      %v1707 = vmul.f32 1.0, %v1706
      %v1708 = vrcp.pop %v1615
      %v1709 = vmul.f32 1.0, %v1708
      %v1710 = vrcp.pop %v1616
      %v1711 = vmul.f32 1.0, %v1710
      %v1712 = vrcp.pop %v1617
      %v1713 = vmul.f32 1.0, %v1712
      %v1714 = vmul.f32 %v1251, %v1619
      %v1715 = vmul.f32 %v1253, %v1621
      %v1716 = vmul.f32 %v1364, %v1623
      %v1717 = vmul.f32 %v1255, %v1625
      %v1718 = vmul.f32 %v1257, %v1627
      %v1719 = vmul.f32 %v1367, %v1629
      %v1720 = vmul.f32 %v1261, %v1631
      %v1721 = vmul.f32 %v1263, %v1633
      %v1722 = vmul.f32 %v1372, %v1635
      %v1723 = vmul.f32 %v1265, %v1637
      %v1724 = vmul.f32 %v1267, %v1639
      %v1725 = vmul.f32 %v1375, %v1641
      %v1726 = vmul.f32 %v1271, %v1643
      %v1727 = vmul.f32 %v1273, %v1645
      %v1728 = vmul.f32 %v1380, %v1647
      %v1729 = vmul.f32 %v1275, %v1649
      %v1730 = vmul.f32 %v1277, %v1651
      %v1731 = vmul.f32 %v1383, %v1653
      %v1732 = vmul.f32 %v1281, %v1655
      %v1733 = vmul.f32 %v1283, %v1657
      %v1734 = vmul.f32 %v1388, %v1659
      %v1735 = vmul.f32 %v1285, %v1661
      %v1736 = vmul.f32 %v1287, %v1663
      %v1737 = vmul.f32 %v1391, %v1665
      %v1738 = vmul.f32 %v1291, %v1667
      %v1739 = vmul.f32 %v1293, %v1669
      %v1740 = vmul.f32 %v1396, %v1671
      %v1741 = vmul.f32 %v1295, %v1673
      %v1742 = vmul.f32 %v1297, %v1675
      %v1743 = vmul.f32 %v1399, %v1677
      %v1744 = vmul.f32 %v1301, %v1679
      %v1745 = vmul.f32 %v1303, %v1681
      %v1746 = vmul.f32 %v1404, %v1683
      %v1747 = vmul.f32 %v1305, %v1685
      %v1748 = vmul.f32 %v1307, %v1687
      %v1749 = vmul.f32 %v1407, %v1689
      %v1750 = vmul.f32 %v1311, %v1691
      %v1751 = vmul.f32 %v1313, %v1693
      %v1752 = vmul.f32 %v1412, %v1695
      %v1753 = vmul.f32 %v1315, %v1697
      %v1754 = vmul.f32 %v1317, %v1699
      %v1755 = vmul.f32 %v1415, %v1701
      %v1756 = vmul.f32 %v1321, %v1703
      %v1757 = vmul.f32 %v1323, %v1705
      %v1758 = vmul.f32 %v1420, %v1707
      %v1759 = vmul.f32 %v1325, %v1709
      %v1760 = vmul.f32 %v1327, %v1711
      %v1761 = vmul.f32 %v1423, %v1713
      %v1762 = vld [vmem:[%s299] sm:$0xff]
      %v1763 = vld [vmem:[%s299 + $0x8] sm:$0xff]
      %v1764 = vld [vmem:[%s299 + $0x10] sm:$0xff]
      %v1765 = vld [vmem:[%s299 + $0x18] sm:$0xff]
      %v1766 = vld [vmem:[%s299 + $0x20] sm:$0xff]
      %v1767 = vld [vmem:[%s299 + $0x28] sm:$0xff]
      %v1768 = vld [vmem:[%s299 + $0x30] sm:$0xff]
      %v1769 = vld [vmem:[%s299 + $0x38] sm:$0xff]
      %v1770 = vld [vmem:[%s299 + $0x40] sm:$0xff]
      %v1771 = vld [vmem:[%s299 + $0x48] sm:$0xff]
      %v1772 = vld [vmem:[%s299 + $0x50] sm:$0xff]
      %v1773 = vld [vmem:[%s299 + $0x58] sm:$0xff]
      %v1774 = vld [vmem:[%s299 + $0x60] sm:$0xff]
      %v1775 = vld [vmem:[%s299 + $0x68] sm:$0xff]
      %v1776 = vld [vmem:[%s299 + $0x70] sm:$0xff]
      %v1777 = vld [vmem:[%s299 + $0x78] sm:$0xff]
      %v1778 = vld [vmem:[%s293] sm:$0xf]
      %v1779 = vld [vmem:[%s293 + $0x4] sm:$0xf]
      %v1780 = vld [vmem:[%s293 + $0x8] sm:$0xf]
      %v1781 = vld [vmem:[%s293 + $0xc] sm:$0xf]
      %v1782 = vld [vmem:[%s293 + $0x10] sm:$0xf]
      %v1783 = vld [vmem:[%s293 + $0x14] sm:$0xf]
      %v1784 = vld [vmem:[%s293 + $0x18] sm:$0xf]
      %v1785 = vld [vmem:[%s293 + $0x1c] sm:$0xf]
      %v1786 = vld [vmem:[%s293 + $0x20] sm:$0xf]
      %v1787 = vld [vmem:[%s293 + $0x24] sm:$0xf]
      %v1788 = vld [vmem:[%s293 + $0x28] sm:$0xf]
      %v1789 = vld [vmem:[%s293 + $0x2c] sm:$0xf]
      %v1790 = vld [vmem:[%s293 + $0x30] sm:$0xf]
      %v1791 = vld [vmem:[%s293 + $0x34] sm:$0xf]
      %v1792 = vld [vmem:[%s293 + $0x38] sm:$0xf]
      %v1793 = vld [vmem:[%s293 + $0x3c] sm:$0xf]
      %v1794 = vld [vmem:[%s293 + $0x40] sm:$0xf]
      %v1795 = vld [vmem:[%s293 + $0x44] sm:$0xf]
      %v1796 = vld [vmem:[%s293 + $0x48] sm:$0xf]
      %v1797 = vld [vmem:[%s293 + $0x4c] sm:$0xf]
      %v1798 = vld [vmem:[%s293 + $0x50] sm:$0xf]
      %v1799 = vld [vmem:[%s293 + $0x54] sm:$0xf]
      %v1800 = vld [vmem:[%s293 + $0x58] sm:$0xf]
      %v1801 = vld [vmem:[%s293 + $0x5c] sm:$0xf]
      %v1802 = vld [vmem:[%s293 + $0x60] sm:$0xf]
      %v1803 = vld [vmem:[%s293 + $0x64] sm:$0xf]
      %v1804 = vld [vmem:[%s293 + $0x68] sm:$0xf]
      %v1805 = vld [vmem:[%s293 + $0x6c] sm:$0xf]
      %v1806 = vld [vmem:[%s293 + $0x70] sm:$0xf]
      %v1807 = vld [vmem:[%s293 + $0x74] sm:$0xf]
      %v1808 = vld [vmem:[%s293 + $0x78] sm:$0xf]
      %v1809 = vld [vmem:[%s293 + $0x7c] sm:$0xf]
      %v1810 = vld [vmem:[%s293 + $0x80] sm:$0xf]
      %v1811 = vld [vmem:[%s293 + $0x84] sm:$0xf]
      %v1812 = vld [vmem:[%s293 + $0x88] sm:$0xf]
      %v1813 = vld [vmem:[%s293 + $0x8c] sm:$0xf]
      %v1814 = vld [vmem:[%s293 + $0x90] sm:$0xf]
      %v1815 = vld [vmem:[%s293 + $0x94] sm:$0xf]
      %v1816 = vld [vmem:[%s293 + $0x98] sm:$0xf]
      %v1817 = vld [vmem:[%s293 + $0x9c] sm:$0xf]
      %v1818 = vld [vmem:[%s293 + $0xa0] sm:$0xf]
      %v1819 = vld [vmem:[%s293 + $0xa4] sm:$0xf]
      %v1820 = vld [vmem:[%s293 + $0xa8] sm:$0xf]
      %v1821 = vld [vmem:[%s293 + $0xac] sm:$0xf]
      %v1822 = vld [vmem:[%s293 + $0xb0] sm:$0xf]
      %v1823 = vld [vmem:[%s293 + $0xb4] sm:$0xf]
      %v1824 = vld [vmem:[%s293 + $0xb8] sm:$0xf]
      %v1825 = vld [vmem:[%s293 + $0xbc] sm:$0xf]
      %v1826 = vunpack.c.l.bf16 %v1778
      %v1827 = vunpack.c.l.bf16 %v1779
      %v1828 = vunpack.c.l.bf16 %v1780
      %v1829 = vunpack.c.l.bf16 %v1781
      %v1830 = vunpack.c.l.bf16 %v1782
      %v1831 = vunpack.c.l.bf16 %v1783
      %v1832 = vunpack.c.l.bf16 %v1784
      %v1833 = vunpack.c.l.bf16 %v1785
      %v1834 = vunpack.c.l.bf16 %v1786
      %v1835 = vunpack.c.l.bf16 %v1787
      %v1836 = vunpack.c.l.bf16 %v1788
      %v1837 = vunpack.c.l.bf16 %v1789
      %v1838 = vunpack.c.l.bf16 %v1790
      %v1839 = vunpack.c.l.bf16 %v1791
      %v1840 = vunpack.c.l.bf16 %v1792
      %v1841 = vunpack.c.l.bf16 %v1793
      %v1842 = vunpack.c.l.bf16 %v1794
      %v1843 = vunpack.c.l.bf16 %v1795
      %v1844 = vunpack.c.l.bf16 %v1796
      %v1845 = vunpack.c.l.bf16 %v1797
      %v1846 = vunpack.c.l.bf16 %v1798
      %v1847 = vunpack.c.l.bf16 %v1799
      %v1848 = vunpack.c.l.bf16 %v1800
      %v1849 = vunpack.c.l.bf16 %v1801
      %v1850 = vunpack.c.l.bf16 %v1802
      %v1851 = vunpack.c.l.bf16 %v1803
      %v1852 = vunpack.c.l.bf16 %v1804
      %v1853 = vunpack.c.l.bf16 %v1805
      %v1854 = vunpack.c.l.bf16 %v1806
      %v1855 = vunpack.c.l.bf16 %v1807
      %v1856 = vunpack.c.l.bf16 %v1808
      %v1857 = vunpack.c.l.bf16 %v1809
      %v1858 = vunpack.c.l.bf16 %v1810
      %v1859 = vunpack.c.l.bf16 %v1811
      %v1860 = vunpack.c.l.bf16 %v1812
      %v1861 = vunpack.c.l.bf16 %v1813
      %v1862 = vunpack.c.l.bf16 %v1814
      %v1863 = vunpack.c.l.bf16 %v1815
      %v1864 = vunpack.c.l.bf16 %v1816
      %v1865 = vunpack.c.l.bf16 %v1817
      %v1866 = vunpack.c.l.bf16 %v1818
      %v1867 = vunpack.c.l.bf16 %v1819
      %v1868 = vunpack.c.l.bf16 %v1820
      %v1869 = vunpack.c.l.bf16 %v1821
      %v1870 = vunpack.c.l.bf16 %v1822
      %v1871 = vunpack.c.l.bf16 %v1823
      %v1872 = vunpack.c.l.bf16 %v1824
      %v1873 = vunpack.c.l.bf16 %v1825
      %1874 = vmatprep.subr.mxu0 0.0
      %1875 = vmatpush1.msra.mxu0 %v1826
      %1876 = vmatprep.subr.mxu0 0.0
      %1877 = vmatpush1.msra.mxu0 %v1827
      %1878 = vmatprep.subr.mxu0 0.0
      %1879 = vmatpush1.msra.mxu0 %v1828
      %1880 = vmatprep.subr.mxu0 0.0
      %1881 = vmatpush1.msra.mxu0 %v1829
      %1882 = vmatprep.subr.mxu0 0.0
      %1883 = vmatpush1.msra.mxu0 %v1830
      %1884 = vmatprep.subr.mxu0 0.0
      %1885 = vmatpush1.msra.mxu0 %v1831
      %1886 = vmatprep.subr.mxu0 0.0
      %1887 = vmatpush1.msra.mxu0 %v1832
      %1888 = vmatprep.subr.mxu0 0.0
      %1889 = vmatpush1.msra.mxu0 %v1833
      %1890 = vmatprep.subr.mxu0 0.0
      %1891 = vmatpush1.msra.mxu0 %v1834
      %1892 = vmatprep.subr.mxu0 0.0
      %1893 = vmatpush1.msra.mxu0 %v1835
      %1894 = vmatprep.subr.mxu0 0.0
      %1895 = vmatpush1.msra.mxu0 %v1836
      %1896 = vmatprep.subr.mxu0 0.0
      %1897 = vmatpush1.msra.mxu0 %v1837
      %1898 = vmatprep.subr.mxu0 0.0
      %1899 = vmatpush1.msra.mxu0 %v1838
      %1900 = vmatprep.subr.mxu0 0.0
      %1901 = vmatpush1.msra.mxu0 %v1839
      %1902 = vmatprep.subr.mxu0 0.0
      %1903 = vmatpush1.msra.mxu0 %v1840
      %1904 = vmatprep.subr.mxu0 0.0
      %1905 = vmatpush1.msra.mxu0 %v1841
      %1906 = vmatprep.subr.mxu0 0.0
      %1907 = vmatpush1.msra.mxu0 %v1842
      %1908 = vmatprep.subr.mxu0 0.0
      %1909 = vmatpush1.msra.mxu0 %v1843
      %1910 = vmatprep.subr.mxu0 0.0
      %1911 = vmatpush1.msra.mxu0 %v1844
      %1912 = vmatprep.subr.mxu0 0.0
      %1913 = vmatpush1.msra.mxu0 %v1845
      %1914 = vmatprep.subr.mxu0 0.0
      %1915 = vmatpush1.msra.mxu0 %v1846
      %1916 = vmatprep.subr.mxu0 0.0
      %1917 = vmatpush1.msra.mxu0 %v1847
      %1918 = vmatprep.subr.mxu0 0.0
      %1919 = vmatpush1.msra.mxu0 %v1848
      %1920 = vmatprep.subr.mxu0 0.0
      %1921 = vmatpush1.msra.mxu0 %v1849
      %1922 = vmatprep.subr.mxu0 0.0
      %1923 = vmatpush1.msra.mxu0 %v1850
      %1924 = vmatprep.subr.mxu0 0.0
      %1925 = vmatpush1.msra.mxu0 %v1851
      %1926 = vmatprep.subr.mxu0 0.0
      %1927 = vmatpush1.msra.mxu0 %v1852
      %1928 = vmatprep.subr.mxu0 0.0
      %1929 = vmatpush1.msra.mxu0 %v1853
      %1930 = vmatprep.subr.mxu0 0.0
      %1931 = vmatpush1.msra.mxu0 %v1854
      %1932 = vmatprep.subr.mxu0 0.0
      %1933 = vmatpush1.msra.mxu0 %v1855
      %1934 = vmatprep.subr.mxu0 0.0
      %1935 = vmatpush1.msra.mxu0 %v1856
      %1936 = vmatprep.subr.mxu0 0.0
      %1937 = vmatpush1.msra.mxu0 %v1857
      %1938 = vmatprep.mubr.f32.mxu0 %v1715
      %1939 = vmatmul.mubr.f32.gmra.mrb[0].mxu0 %v1714
      %v1940 = vpop.f32.mrb[0].mxu0
      %v1941 = vadd.f32 0.0, %v1940
      %v1942 = vpop.f32.mrb[0].mxu0
      %1943 = vmatprep.mubr.f32.mxu0 %v1718
      %1944 = vmatmul.mubr.f32.gmra.mrb[0].mxu0 %v1717
      %v1945 = vpop.f32.mrb[0].mxu0
      %v1946 = vadd.f32 0.0, %v1945
      %v1947 = vpop.f32.mrb[0].mxu0
      %1948 = vmatprep.mubr.f32.mxu0 %v1721
      %1949 = vmatmul.mubr.f32.gmra.mrb[0].mxu0 %v1720
      %v1950 = vpop.f32.mrb[0].mxu0
      %v1951 = vadd.f32 0.0, %v1950
      %v1952 = vpop.f32.mrb[0].mxu0
      %1953 = vmatprep.mubr.f32.mxu0 %v1724
      %1954 = vmatmul.mubr.f32.gmra.mrb[0].mxu0 %v1723
      %v1955 = vpop.f32.mrb[0].mxu0
      %v1956 = vadd.f32 0.0, %v1955
      %v1957 = vpop.f32.mrb[0].mxu0
      %1958 = vmatprep.mubr.f32.mxu0 %v1727
      %1959 = vmatmul.mubr.f32.gmra.mrb[0].mxu0 %v1726
      %v1960 = vpop.f32.mrb[0].mxu0
      %v1961 = vadd.f32 0.0, %v1960
      %v1962 = vpop.f32.mrb[0].mxu0
      %1963 = vmatprep.mubr.f32.mxu0 %v1730
      %1964 = vmatmul.mubr.f32.gmra.mrb[0].mxu0 %v1729
      %v1965 = vpop.f32.mrb[0].mxu0
      %v1966 = vadd.f32 0.0, %v1965
      %v1967 = vpop.f32.mrb[0].mxu0
      %1968 = vmatprep.mubr.f32.mxu0 %v1733
      %1969 = vmatmul.mubr.f32.gmra.mrb[0].mxu0 %v1732
      %v1970 = vpop.f32.mrb[0].mxu0
      %v1971 = vadd.f32 0.0, %v1970
      %v1972 = vpop.f32.mrb[0].mxu0
      %1973 = vmatprep.mubr.f32.mxu0 %v1736
      %1974 = vmatmul.mubr.f32.gmra.mrb[0].mxu0 %v1735
      %v1975 = vpop.f32.mrb[0].mxu0
      %v1976 = vadd.f32 0.0, %v1975
      %v1977 = vpop.f32.mrb[0].mxu0
      %1978 = vmatprep.mubr.f32.mxu0 %v1739
      %1979 = vmatmul.mubr.f32.gmra.mrb[0].mxu0 %v1738
      %v1980 = vpop.f32.mrb[0].mxu0
      %v1981 = vadd.f32 0.0, %v1980
      %v1982 = vpop.f32.mrb[0].mxu0
      %1983 = vmatprep.mubr.f32.mxu0 %v1742
      %1984 = vmatmul.mubr.f32.gmra.mrb[0].mxu0 %v1741
      %v1985 = vpop.f32.mrb[0].mxu0
      %v1986 = vadd.f32 0.0, %v1985
      %v1987 = vpop.f32.mrb[0].mxu0
      %1988 = vmatprep.mubr.f32.mxu0 %v1745
      %1989 = vmatmul.mubr.f32.gmra.mrb[0].mxu0 %v1744
      %v1990 = vpop.f32.mrb[0].mxu0
      %v1991 = vadd.f32 0.0, %v1990
      %v1992 = vpop.f32.mrb[0].mxu0
      %1993 = vmatprep.mubr.f32.mxu0 %v1748
      %1994 = vmatmul.mubr.f32.gmra.mrb[0].mxu0 %v1747
      %v1995 = vpop.f32.mrb[0].mxu0
      %v1996 = vadd.f32 0.0, %v1995
      %v1997 = vpop.f32.mrb[0].mxu0
      %1998 = vmatprep.mubr.f32.mxu0 %v1751
      %1999 = vmatmul.mubr.f32.gmra.mrb[0].mxu0 %v1750
      %v2000 = vpop.f32.mrb[0].mxu0
      %v2001 = vadd.f32 0.0, %v2000
      %v2002 = vpop.f32.mrb[0].mxu0
      %2003 = vmatprep.mubr.f32.mxu0 %v1754
      %2004 = vmatmul.mubr.f32.gmra.mrb[0].mxu0 %v1753
      %v2005 = vpop.f32.mrb[0].mxu0
      %v2006 = vadd.f32 0.0, %v2005
      %v2007 = vpop.f32.mrb[0].mxu0
      %2008 = vmatprep.mubr.f32.mxu0 %v1757
      %2009 = vmatmul.mubr.f32.gmra.mrb[0].mxu0 %v1756
      %v2010 = vpop.f32.mrb[0].mxu0
      %v2011 = vadd.f32 0.0, %v2010
      %v2012 = vpop.f32.mrb[0].mxu0
      %2013 = vmatprep.mubr.f32.mxu0 %v1760
      %2014 = vmatmul.mubr.f32.gmra.mrb[0].mxu0 %v1759
      %v2015 = vpop.f32.mrb[0].mxu0
      %v2016 = vadd.f32 0.0, %v2015
      %v2017 = vpop.f32.mrb[0].mxu0
      %2018 = vdwg.mxu0
      %2019 = vmatprep.subr.mxu0 0.0
      %2020 = vmatpush1.msra.mxu0 %v1858
      %2021 = vmatprep.subr.mxu0 0.0
      %2022 = vmatpush1.msra.mxu0 %v1859
      %2023 = vmatprep.subr.mxu0 0.0
      %2024 = vmatpush1.msra.mxu0 %v1860
      %2025 = vmatprep.subr.mxu0 0.0
      %2026 = vmatpush1.msra.mxu0 %v1861
      %2027 = vmatprep.subr.mxu0 0.0
      %2028 = vmatpush1.msra.mxu0 %v1862
      %2029 = vmatprep.subr.mxu0 0.0
      %2030 = vmatpush1.msra.mxu0 %v1863
      %2031 = vmatprep.subr.mxu0 0.0
      %2032 = vmatpush1.msra.mxu0 %v1864
      %2033 = vmatprep.subr.mxu0 0.0
      %2034 = vmatpush1.msra.mxu0 %v1865
      %2035 = vmatprep.subr.mxu0 0.0
      %2036 = vmatpush1.msra.mxu0 %v1866
      %2037 = vmatprep.subr.mxu0 0.0
      %2038 = vmatpush1.msra.mxu0 %v1867
      %2039 = vmatprep.subr.mxu0 0.0
      %2040 = vmatpush1.msra.mxu0 %v1868
      %2041 = vmatprep.subr.mxu0 0.0
      %2042 = vmatpush1.msra.mxu0 %v1869
      %2043 = vmatprep.subr.mxu0 0.0
      %2044 = vmatpush1.msra.mxu0 %v1870
      %2045 = vmatprep.subr.mxu0 0.0
      %2046 = vmatpush1.msra.mxu0 %v1871
      %2047 = vmatprep.subr.mxu0 0.0
      %2048 = vmatpush1.msra.mxu0 %v1872
      %2049 = vmatprep.subr.mxu0 0.0
      %2050 = vmatpush1.msra.mxu0 %v1873
      %2051 = vmatprep.subr.mxu0 0.0
      %2052 = vmatpush1.msra.mxu0 0.0
      %2053 = vmatprep.subr.mxu0 0.0
      %2054 = vmatpush1.msra.mxu0 0.0
      %2055 = vmatprep.subr.mxu0 0.0
      %2056 = vmatpush1.msra.mxu0 0.0
      %2057 = vmatprep.subr.mxu0 0.0
      %2058 = vmatpush1.msra.mxu0 0.0
      %2059 = vmatprep.subr.mxu0 0.0
      %2060 = vmatpush1.msra.mxu0 0.0
      %2061 = vmatprep.subr.mxu0 0.0
      %2062 = vmatpush1.msra.mxu0 0.0
      %2063 = vmatprep.subr.mxu0 0.0
      %2064 = vmatpush1.msra.mxu0 0.0
      %2065 = vmatprep.subr.mxu0 0.0
      %2066 = vmatpush1.msra.mxu0 0.0
      %2067 = vmatprep.subr.mxu0 0.0
      %2068 = vmatpush1.msra.mxu0 0.0
      %2069 = vmatprep.subr.mxu0 0.0
      %2070 = vmatpush1.msra.mxu0 0.0
      %2071 = vmatprep.subr.mxu0 0.0
      %2072 = vmatpush1.msra.mxu0 0.0
      %2073 = vmatprep.subr.mxu0 0.0
      %2074 = vmatpush1.msra.mxu0 0.0
      %2075 = vmatprep.subr.mxu0 0.0
      %2076 = vmatpush1.msra.mxu0 0.0
      %2077 = vmatprep.subr.mxu0 0.0
      %2078 = vmatpush1.msra.mxu0 0.0
      %2079 = vmatprep.subr.mxu0 0.0
      %2080 = vmatpush1.msra.mxu0 0.0
      %2081 = vmatprep.subr.mxu0 0.0
      %2082 = vmatpush1.msra.mxu0 0.0
      %2083 = vmatprep.mubr.f32.mxu0 0.0
      %2084 = vmatmul.mubr.f32.gmra.mrb[0].mxu0 %v1716
      %v2085 = vpop.f32.mrb[0].mxu0
      %v2086 = vadd.f32 %v1941, %v2085
      %v2087 = vpop.f32.mrb[0].mxu0
      %2088 = vmatprep.mubr.f32.mxu0 0.0
      %2089 = vmatmul.mubr.f32.gmra.mrb[0].mxu0 %v1719
      %v2090 = vpop.f32.mrb[0].mxu0
      %v2091 = vadd.f32 %v1946, %v2090
      %v2092 = vpop.f32.mrb[0].mxu0
      %2093 = vmatprep.mubr.f32.mxu0 0.0
      %2094 = vmatmul.mubr.f32.gmra.mrb[0].mxu0 %v1722
      %v2095 = vpop.f32.mrb[0].mxu0
      %v2096 = vadd.f32 %v1951, %v2095
      %v2097 = vpop.f32.mrb[0].mxu0
      %2098 = vmatprep.mubr.f32.mxu0 0.0
      %2099 = vmatmul.mubr.f32.gmra.mrb[0].mxu0 %v1725
      %v2100 = vpop.f32.mrb[0].mxu0
      %v2101 = vadd.f32 %v1956, %v2100
      %v2102 = vpop.f32.mrb[0].mxu0
      %2103 = vmatprep.mubr.f32.mxu0 0.0
      %2104 = vmatmul.mubr.f32.gmra.mrb[0].mxu0 %v1728
      %v2105 = vpop.f32.mrb[0].mxu0
      %v2106 = vadd.f32 %v1961, %v2105
      %v2107 = vpop.f32.mrb[0].mxu0
      %2108 = vmatprep.mubr.f32.mxu0 0.0
      %2109 = vmatmul.mubr.f32.gmra.mrb[0].mxu0 %v1731
      %v2110 = vpop.f32.mrb[0].mxu0
      %v2111 = vadd.f32 %v1966, %v2110
      %v2112 = vpop.f32.mrb[0].mxu0
      %2113 = vmatprep.mubr.f32.mxu0 0.0
      %2114 = vmatmul.mubr.f32.gmra.mrb[0].mxu0 %v1734
      %v2115 = vpop.f32.mrb[0].mxu0
      %v2116 = vadd.f32 %v1971, %v2115
      %v2117 = vpop.f32.mrb[0].mxu0
      %2118 = vmatprep.mubr.f32.mxu0 0.0
      %2119 = vmatmul.mubr.f32.gmra.mrb[0].mxu0 %v1737
      %v2120 = vpop.f32.mrb[0].mxu0
      %v2121 = vadd.f32 %v1976, %v2120
      %v2122 = vpop.f32.mrb[0].mxu0
      %2123 = vmatprep.mubr.f32.mxu0 0.0
      %2124 = vmatmul.mubr.f32.gmra.mrb[0].mxu0 %v1740
      %v2125 = vpop.f32.mrb[0].mxu0
      %v2126 = vadd.f32 %v1981, %v2125
      %v2127 = vpop.f32.mrb[0].mxu0
      %2128 = vmatprep.mubr.f32.mxu0 0.0
      %2129 = vmatmul.mubr.f32.gmra.mrb[0].mxu0 %v1743
      %v2130 = vpop.f32.mrb[0].mxu0
      %v2131 = vadd.f32 %v1986, %v2130
      %v2132 = vpop.f32.mrb[0].mxu0
      %2133 = vmatprep.mubr.f32.mxu0 0.0
      %2134 = vmatmul.mubr.f32.gmra.mrb[0].mxu0 %v1746
      %v2135 = vpop.f32.mrb[0].mxu0
      %v2136 = vadd.f32 %v1991, %v2135
      %v2137 = vpop.f32.mrb[0].mxu0
      %2138 = vmatprep.mubr.f32.mxu0 0.0
      %2139 = vmatmul.mubr.f32.gmra.mrb[0].mxu0 %v1749
      %v2140 = vpop.f32.mrb[0].mxu0
      %v2141 = vadd.f32 %v1996, %v2140
      %v2142 = vpop.f32.mrb[0].mxu0
      %2143 = vmatprep.mubr.f32.mxu0 0.0
      %2144 = vmatmul.mubr.f32.gmra.mrb[0].mxu0 %v1752
      %v2145 = vpop.f32.mrb[0].mxu0
      %v2146 = vadd.f32 %v2001, %v2145
      %v2147 = vpop.f32.mrb[0].mxu0
      %2148 = vmatprep.mubr.f32.mxu0 0.0
      %2149 = vmatmul.mubr.f32.gmra.mrb[0].mxu0 %v1755
      %v2150 = vpop.f32.mrb[0].mxu0
      %v2151 = vadd.f32 %v2006, %v2150
      %v2152 = vpop.f32.mrb[0].mxu0
      %2153 = vmatprep.mubr.f32.mxu0 0.0
      %2154 = vmatmul.mubr.f32.gmra.mrb[0].mxu0 %v1758
      %v2155 = vpop.f32.mrb[0].mxu0
      %v2156 = vadd.f32 %v2011, %v2155
      %v2157 = vpop.f32.mrb[0].mxu0
      %2158 = vmatprep.mubr.f32.mxu0 0.0
      %2159 = vmatmul.mubr.f32.gmra.mrb[0].mxu0 %v1761
      %v2160 = vpop.f32.mrb[0].mxu0
      %v2161 = vadd.f32 %v2016, %v2160
      %v2162 = vpop.f32.mrb[0].mxu0
      %2163 = vdwg.mxu0
      %v2164 = vadd.f32 %v1762, %v2086
      %v2165 = vadd.f32 %v1763, %v2091
      %v2166 = vadd.f32 %v1764, %v2096
      %v2167 = vadd.f32 %v1765, %v2101
      %v2168 = vadd.f32 %v1766, %v2106
      %v2169 = vadd.f32 %v1767, %v2111
      %v2170 = vadd.f32 %v1768, %v2116
      %v2171 = vadd.f32 %v1769, %v2121
      %v2172 = vadd.f32 %v1770, %v2126
      %v2173 = vadd.f32 %v1771, %v2131
      %v2174 = vadd.f32 %v1772, %v2136
      %v2175 = vadd.f32 %v1773, %v2141
      %v2176 = vadd.f32 %v1774, %v2146
      %v2177 = vadd.f32 %v1775, %v2151
      %v2178 = vadd.f32 %v1776, %v2156
      %v2179 = vadd.f32 %v1777, %v2161
      %vm2180 = vcmask 7168
      %2181 = vst.msk [vmem:[%s299] sm:$0xff] %vm2180, %v2164
      %2182 = vst.msk [vmem:[%s299 + $0x8] sm:$0xff] %vm2180, %v2165
      %2183 = vst.msk [vmem:[%s299 + $0x10] sm:$0xff] %vm2180, %v2166
      %2184 = vst.msk [vmem:[%s299 + $0x18] sm:$0xff] %vm2180, %v2167
      %2185 = vst.msk [vmem:[%s299 + $0x20] sm:$0xff] %vm2180, %v2168
      %2186 = vst.msk [vmem:[%s299 + $0x28] sm:$0xff] %vm2180, %v2169
      %2187 = vst.msk [vmem:[%s299 + $0x30] sm:$0xff] %vm2180, %v2170
      %2188 = vst.msk [vmem:[%s299 + $0x38] sm:$0xff] %vm2180, %v2171
      %2189 = vst.msk [vmem:[%s299 + $0x40] sm:$0xff] %vm2180, %v2172
      %2190 = vst.msk [vmem:[%s299 + $0x48] sm:$0xff] %vm2180, %v2173
      %2191 = vst.msk [vmem:[%s299 + $0x50] sm:$0xff] %vm2180, %v2174
      %2192 = vst.msk [vmem:[%s299 + $0x58] sm:$0xff] %vm2180, %v2175
      %2193 = vst.msk [vmem:[%s299 + $0x60] sm:$0xff] %vm2180, %v2176
      %2194 = vst.msk [vmem:[%s299 + $0x68] sm:$0xff] %vm2180, %v2177
      %2195 = vst.msk [vmem:[%s299 + $0x70] sm:$0xff] %vm2180, %v2178
      %2196 = vst.msk [vmem:[%s299 + $0x78] sm:$0xff] %vm2180, %v2179
      // Predicated region
      $region49: #{covid_effnet_forward.1} parent=43 // pred_check
        %p2197 = pneg %p301
      $region50: #{covid_effnet_forward.1} parent=43 // pred_check_branch
        %2199 = sbr.rel (%p2197) target = $region52
      $region51: #{covid_effnet_forward.1} parent=43 // pred_region
        %v2200 = vld [vmem:[%s299] sm:$0xff]
        %v2201 = vld [vmem:[%s299 + $0x8] sm:$0xff]
        %v2202 = vld [vmem:[%s299 + $0x10] sm:$0xff]
        %v2203 = vld [vmem:[%s299 + $0x18] sm:$0xff]
        %v2204 = vld [vmem:[%s299 + $0x20] sm:$0xff]
        %v2205 = vld [vmem:[%s299 + $0x28] sm:$0xff]
        %v2206 = vld [vmem:[%s299 + $0x30] sm:$0xff]
        %v2207 = vld [vmem:[%s299 + $0x38] sm:$0xff]
        %v2208 = vld [vmem:[%s299 + $0x40] sm:$0xff]
        %v2209 = vld [vmem:[%s299 + $0x48] sm:$0xff]
        %v2210 = vld [vmem:[%s299 + $0x50] sm:$0xff]
        %v2211 = vld [vmem:[%s299 + $0x58] sm:$0xff]
        %v2212 = vld [vmem:[%s299 + $0x60] sm:$0xff]
        %v2213 = vld [vmem:[%s299 + $0x68] sm:$0xff]
        %v2214 = vld [vmem:[%s299 + $0x70] sm:$0xff]
        %v2215 = vld [vmem:[%s299 + $0x78] sm:$0xff]
        %v2216 = vmul.f32 %v2200, 0.00390625
        %v2217 = vmul.f32 %v2201, 0.00390625
        %v2218 = vmul.f32 %v2202, 0.00390625
        %v2219 = vmul.f32 %v2203, 0.00390625
        %v2220 = vmul.f32 %v2204, 0.00390625
        %v2221 = vmul.f32 %v2205, 0.00390625
        %v2222 = vmul.f32 %v2206, 0.00390625
        %v2223 = vmul.f32 %v2207, 0.00390625
        %v2224 = vmul.f32 %v2208, 0.00390625
        %v2225 = vmul.f32 %v2209, 0.00390625
        %v2226 = vmul.f32 %v2210, 0.00390625
        %v2227 = vmul.f32 %v2211, 0.00390625
        %v2228 = vmul.f32 %v2212, 0.00390625
        %v2229 = vmul.f32 %v2213, 0.00390625
        %v2230 = vmul.f32 %v2214, 0.00390625
        %v2231 = vmul.f32 %v2215, 0.00390625
        %2232 = vst.msk [vmem:[%s299] sm:$0xff] %vm2180, %v2216
        %2233 = vst.msk [vmem:[%s299 + $0x8] sm:$0xff] %vm2180, %v2217
        %2234 = vst.msk [vmem:[%s299 + $0x10] sm:$0xff] %vm2180, %v2218
        %2235 = vst.msk [vmem:[%s299 + $0x18] sm:$0xff] %vm2180, %v2219
        %2236 = vst.msk [vmem:[%s299 + $0x20] sm:$0xff] %vm2180, %v2220
        %2237 = vst.msk [vmem:[%s299 + $0x28] sm:$0xff] %vm2180, %v2221
        %2238 = vst.msk [vmem:[%s299 + $0x30] sm:$0xff] %vm2180, %v2222
        %2239 = vst.msk [vmem:[%s299 + $0x38] sm:$0xff] %vm2180, %v2223
        %2240 = vst.msk [vmem:[%s299 + $0x40] sm:$0xff] %vm2180, %v2224
        %2241 = vst.msk [vmem:[%s299 + $0x48] sm:$0xff] %vm2180, %v2225
        %2242 = vst.msk [vmem:[%s299 + $0x50] sm:$0xff] %vm2180, %v2226
        %2243 = vst.msk [vmem:[%s299 + $0x58] sm:$0xff] %vm2180, %v2227
        %2244 = vst.msk [vmem:[%s299 + $0x60] sm:$0xff] %vm2180, %v2228
        %2245 = vst.msk [vmem:[%s299 + $0x68] sm:$0xff] %vm2180, %v2229
        %2246 = vst.msk [vmem:[%s299 + $0x70] sm:$0xff] %vm2180, %v2230
        %2247 = vst.msk [vmem:[%s299 + $0x78] sm:$0xff] %vm2180, %v2231
      $region52: #{covid_effnet_forward.1} parent=43 // pred_fallthru
        _
      %p2248 = scmp.lt.s32.totalorder %s21, 1
      %s2249 = scalar_select %p2248, %s21, 1
      %s2250 = smul.addr %s2249, 16
      %s2251 = smul.addr %s2250, 8
      %s2252 = scalar_lea.vmem %s6, %s2251
      // Predicated region
      $region53: #{covid_effnet_forward.1} parent=43 // pred_check
        %p2253 = pneg %p185
      $region54: #{covid_effnet_forward.1} parent=43 // pred_check_branch
        %2255 = sbr.rel (%p2253) target = $region56
      $region55: #{covid_effnet_forward.1} parent=43 // pred_region
        _
      $region56: #{covid_effnet_forward.1} parent=43 // pred_fallthru
        _
    $region44: #{covid_effnet_forward.1} parent=5 // pred_fallthru
      _
    %p2256 = scmp.le.s32.totalorder 2, %s12
    // Predicated region
    $region57: #{covid_effnet_forward.1} parent=5 // pred_check
      %p2257 = pneg %p2256
    $region58: #{covid_effnet_forward.1} parent=5 // pred_check_branch
      %2259 = sbr.rel (%p2257) target = $region60
    $region59: #{covid_effnet_forward.1} parent=5 // pred_region
      %s2260 = ssub.s32 %s12, 2
      // Predicated region
      $region61: #{covid_effnet_forward.1} parent=59 // pred_check
        %p2261 = pneg %p191
      $region62: #{covid_effnet_forward.1} parent=59 // pred_check_branch
        %2263 = sbr.rel (%p2261) target = $region64
      $region63: #{covid_effnet_forward.1} parent=59 // pred_region
        %p2264 = scmp.lt.s32.totalorder %s23, 1
        %s2265 = scalar_select %p2264, %s23, 1
        %s2266 = smul.addr %s2265, 16
        %s2267 = smul.addr %s2266, 8
        %s2268 = scalar_lea.vmem %s6, %s2267
      $region64: #{covid_effnet_forward.1} parent=59 // pred_fallthru
        _
    $region60: #{covid_effnet_forward.1} parent=5 // pred_fallthru
      _
  $region6: #{covid_effnet_forward.1} parent=0 // loop_footer
    %s16 = sadd.s32 1, %s12
  $region7: #{covid_effnet_forward.1} parent=0 // loop_footer_branch
    %11 = sbr.rel target = $region3
  $region8: #{covid_effnet_forward.1} parent=0 // loop_exit
    _

</llo_original>
